<compile_context>
chip_gen: v6e
topology: v6e:2x2x1
jax: 0.10.0
libtpu: 0.0.40
codegen_flags: <defaults>
</compile_context>

<pallas_src>
import functools
import math

import jax
import jax.numpy as jnp
from jax.experimental import pallas as pl
from jax.experimental.pallas import tpu as pltpu

HIDDEN = 100      # logical hidden width (matches nn.Linear(..., 100))
OUT = 1           # logical output width
LANE = 128        # TPU lane width
HIDDEN_P = 128    # padded hidden width (lane-dense)


def _round_up(x, m):
    return (x + m - 1) // m * m


def _sigmoid_f32(x):
    # One EUP transcendental per element (tanh) instead of exp + reciprocal.
    return 0.5 * jnp.tanh(0.5 * x) + 0.5


def dense3_kernel(x_ref, w1_ref, w2_ref, w3_ref, vec_ref, o_ref):
    """Fused forward: 3 x (Linear + Sigmoid) followed by Linear(HIDDEN, 1).

    x_ref : f32 [bm, F]        (cast to bf16 in-kernel)
    w*_ref: bf16 padded weights
    vec_ref: f32 [5, 128] = [b1; b2; b3; b4 broadcast over lanes; w4^T]
    o_ref : f32 [bm/128, 128]  (batch-in-lanes output tile)
    """
    x = x_ref[...].astype(jnp.bfloat16)                       # VPU cast, free under DMA
    b1 = vec_ref[0:1, :]
    b2 = vec_ref[1:2, :]
    b3 = vec_ref[2:3, :]
    b4 = vec_ref[3:4, :]                                      # same value in every lane
    w4 = vec_ref[4:5, :].reshape(1, 1, HIDDEN_P)              # final-layer weights (row)

    h = _sigmoid_f32(
        jnp.dot(x, w1_ref[...], preferred_element_type=jnp.float32) + b1)
    h = _sigmoid_f32(
        jnp.dot(h.astype(jnp.bfloat16), w2_ref[...],
                preferred_element_type=jnp.float32) + b2)
    h = _sigmoid_f32(
        jnp.dot(h.astype(jnp.bfloat16), w3_ref[...],
                preferred_element_type=jnp.float32) + b3)      # f32 [bm, 128]

    bm = x_ref.shape[0]
    # Final Linear(HIDDEN, 1): per-row dot with w4 -> batch lands in lanes.
    # Leading-dim split reshape is free (layout unchanged).
    h3 = h.reshape(bm // LANE, LANE, HIDDEN_P)
    out = jnp.sum(h3 * w4, axis=-1) + b4                       # [bm/128, 128]
    o_ref[...] = out.astype(o_ref.dtype)


def _pick_block_b(B, F):
    """Batch-tile size: multiple of 128, VMEM-footprint aware."""
    # Per-row in-kernel footprint estimate (bytes):
    #   double-buffered f32 x tile (8F) + in-kernel bf16 x copy (2F)
    #   + a handful of f32/bf16 [*,128] activation temps (~3 KiB).
    per_row = 10 * F + 3 * 1024
    cap = (24 * 1024 * 1024) // per_row         # stay well under 32 MiB scoped VMEM
    cap = max(128, min(2048, cap))
    cap = (cap // LANE) * LANE

    b128 = _round_up(B, LANE)
    if b128 <= cap:
        if b128 >= 2048:
            # Split into 2 grid steps so both v7x TensorCores get work.
            return _round_up(-(-B // 2), LANE)
        return b128
    return cap


@functools.partial(jax.jit, static_argnames=("block_b",))
def dense3_forward(x_flat, packed, *, block_b=None):
    """x_flat: [B, F] float32.  packed: packed params.  Returns [B, 1] f32."""
    B, F = x_flat.shape
    if block_b is None:
        block_b = _pick_block_b(B, F)
    grid = (pl.cdiv(B, block_b),)
    rows = block_b // LANE                      # output sublane rows per tile

    rep = lambda i: (0, 0)                      # weights / vecs replicated per tile

    out3 = pl.pallas_call(
        dense3_kernel,
        out_shape=jax.ShapeDtypeStruct((grid[0], rows, LANE), jnp.float32),
        grid_spec=pl.GridSpec(
            grid=grid,
            in_specs=[
                pl.BlockSpec((block_b, F), lambda i: (i, 0)),   # x tile (f32, ragged tail OK)
                pl.BlockSpec((F, HIDDEN_P), rep),               # w1 (bf16)
                pl.BlockSpec((HIDDEN_P, HIDDEN_P), rep),        # w2 (bf16)
                pl.BlockSpec((HIDDEN_P, HIDDEN_P), rep),        # w3 (bf16)
                pl.BlockSpec((5, HIDDEN_P), rep),               # [b1;b2;b3;b4;w4^T] (f32)
            ],
            out_specs=pl.BlockSpec((None, rows, LANE), lambda i: (i, 0, 0)),
        ),
        compiler_params=pltpu.CompilerParams(
            dimension_semantics=("parallel",),      # megacore sharding on v7x
            # Footprint is budgeted to <~24 MiB; 32 MiB is safe on all gens.
            # (Raise on v5e/v6e if sweeping block_b beyond 2048.)
            vmem_limit_bytes=32 * 1024 * 1024,
        ),
    )(x_flat, packed["w1"], packed["w2"], packed["w3"], packed["vecs"])

    # (grid, rows, 128) -> (grid*block_b, 1); element (g, r, c) is batch row
    # g*block_b + r*128 + c.  Cheap: only ~4 B/row of real data.
    return out3.reshape(-1, 1)[:B]


def init_params(key, in_features):
    """Deterministic init mirroring nn.Linear (uniform +/- 1/sqrt(fan_in)), f32."""
    def linear(k, fan_in, fan_out):
        kw, kb = jax.random.split(k)
        bound = 1.0 / jnp.sqrt(jnp.float32(fan_in))
        w = jax.random.uniform(kw, (fan_in, fan_out), jnp.float32,
                               minval=-bound, maxval=bound)
        b = jax.random.uniform(kb, (1, fan_out), jnp.float32,
                               minval=-bound, maxval=bound)
        return w, b

    k1, k2, k3, k4 = jax.random.split(key, 4)
    w1, b1 = linear(k1, in_features, HIDDEN)
    w2, b2 = linear(k2, HIDDEN, HIDDEN)
    w3, b3 = linear(k3, HIDDEN, HIDDEN)
    w4, b4 = linear(k4, HIDDEN, OUT)
    return {"w1": w1, "b1": b1, "w2": w2, "b2": b2,
            "w3": w3, "b3": b3, "w4": w4, "b4": b4}


def pack_params(p):
    """Zero-pad hidden dims to 128, cast weights to bf16, pack the small vectors.

    Zero padding of w2/w3 rows, of the padded bias lanes and of the w4 row
    guarantees that sigmoid(0)=0.5 values living in padded hidden lanes
    contribute exactly 0 to the real output.
    """
    F = p["w1"].shape[0]

    def padw(w, rows, cols):
        return jnp.pad(w, ((0, rows - w.shape[0]),
                           (0, cols - w.shape[1]))).astype(jnp.bfloat16)

    def padrow(v):  # (1, n) f32 -> (1, HIDDEN_P) f32
        return jnp.pad(v, ((0, 0), (0, HIDDEN_P - v.shape[1]))).astype(jnp.float32)

    b4_bcast = jnp.full((1, HIDDEN_P), p["b4"][0, 0], jnp.float32)
    vecs = jnp.concatenate(
        [padrow(p["b1"]), padrow(p["b2"]), padrow(p["b3"]),
         b4_bcast, padrow(p["w4"].T)], axis=0)                # (5, 128) f32

    return {
        "w1": padw(p["w1"], F, HIDDEN_P),            # (F, 128)   bf16
        "w2": padw(p["w2"], HIDDEN_P, HIDDEN_P),     # (128, 128) bf16
        "w3": padw(p["w3"], HIDDEN_P, HIDDEN_P),     # (128, 128) bf16
        "vecs": vecs,
    }


def reference_forward(x_flat, p):
    h = jax.nn.sigmoid(x_flat @ p["w1"] + p["b1"])
    h = jax.nn.sigmoid(h @ p["w2"] + p["b2"])
    h = jax.nn.sigmoid(h @ p["w3"] + p["b3"])
    return h @ p["w4"] + p["b4"]


if __name__ == "__main__":
    # Small analogue of the module docstring example (in_shape=(2, 30, 40)).
    batch = 8
    in_shape = (2, 16, 16)                     # event shape I = {I_1, ..., I_n}
    in_features = math.prod(in_shape)          # = in_shape.numel() = 512

    key = jax.random.PRNGKey(0)
    kx, kp = jax.random.split(key)
    x = jax.random.uniform(kx, (batch, *in_shape), jnp.float32)  # like torch.rand
    raw_params = init_params(kp, in_features)
    packed_params = pack_params(raw_params)

    # Flatten(start_dim=-len(in_shape)) -> [B, F]  (glue, plain JAX)
    x_flat = x.reshape(batch, -1)

    out = dense3_forward(x_flat, packed_params)
    out = jax.block_until_ready(out)

    assert out.shape == (batch, OUT), out.shape
    ref = reference_forward(x_flat, raw_params)
    max_err = float(jnp.max(jnp.abs(out - ref)))
    # bf16 matmul inputs loosen agreement vs. the f32 reference.
    assert max_err < 3e-2, max_err

    print("KERNEL_OK")
</pallas_src>

<mosaic_0001>
module attributes {stable_mosaic.version = 11 : i64} {
  func.func @dense3_kernel(%arg0: i32, %arg1: memref<128x512xf32, #tpu.memory_space<vmem>>, %arg2: memref<512x128xbf16, #tpu.memory_space<vmem>>, %arg3: memref<128x128xbf16, #tpu.memory_space<vmem>>, %arg4: memref<128x128xbf16, #tpu.memory_space<vmem>>, %arg5: memref<5x128xf32, #tpu.memory_space<vmem>>, %arg6: memref<1x1x128xf32, #tpu.memory_space<vmem>>) attributes {dimension_semantics = [#tpu.dimension_semantics<parallel>], iteration_bounds = array<i64: 1>, scalar_prefetch = 0 : i64, scratch_operands = 0 : i64, tpu.core_type = #tpu.core_type<tc>, window_params = [{transform_indices = @transform_0, window_bounds = array<i64: 128, 512>}, {pipeline_mode = #tpu.pipeline_mode<synchronous>, transform_indices = @transform_1, window_bounds = array<i64: 512, 128>}, {pipeline_mode = #tpu.pipeline_mode<synchronous>, transform_indices = @transform_2, window_bounds = array<i64: 128, 128>}, {pipeline_mode = #tpu.pipeline_mode<synchronous>, transform_indices = @transform_3, window_bounds = array<i64: 128, 128>}, {pipeline_mode = #tpu.pipeline_mode<synchronous>, transform_indices = @transform_4, window_bounds = array<i64: 5, 128>}, {transform_indices = @transform_5, window_bounds = array<i64: 1, 1, 128>}]} {
    %c0 = arith.constant 0 : index
    %c0_0 = arith.constant 0 : index
    %0 = vector.load %arg1[%c0, %c0_0] : memref<128x512xf32, #tpu.memory_space<vmem>>, vector<128x512xf32>
    %1 = arith.truncf %0 : vector<128x512xf32> to vector<128x512xbf16>
    %c0_1 = arith.constant 0 : index
    %c0_2 = arith.constant 0 : index
    %2 = vector.load %arg5[%c0_1, %c0_2] : memref<5x128xf32, #tpu.memory_space<vmem>>, vector<1x128xf32>
    %c1 = arith.constant 1 : index
    %c0_3 = arith.constant 0 : index
    %3 = vector.load %arg5[%c1, %c0_3] : memref<5x128xf32, #tpu.memory_space<vmem>>, vector<1x128xf32>
    %c2 = arith.constant 2 : index
    %c0_4 = arith.constant 0 : index
    %4 = vector.load %arg5[%c2, %c0_4] : memref<5x128xf32, #tpu.memory_space<vmem>>, vector<1x128xf32>
    %c3 = arith.constant 3 : index
    %c0_5 = arith.constant 0 : index
    %5 = vector.load %arg5[%c3, %c0_5] : memref<5x128xf32, #tpu.memory_space<vmem>>, vector<1x128xf32>
    %c4 = arith.constant 4 : index
    %c0_6 = arith.constant 0 : index
    %6 = vector.load %arg5[%c4, %c0_6] : memref<5x128xf32, #tpu.memory_space<vmem>>, vector<1x128xf32>
    %7 = vector.shape_cast %6 : vector<1x128xf32> to vector<1x1x128xf32>
    %c0_7 = arith.constant 0 : index
    %c0_8 = arith.constant 0 : index
    %8 = vector.load %arg2[%c0_7, %c0_8] : memref<512x128xbf16, #tpu.memory_space<vmem>>, vector<512x128xbf16>
    %cst = arith.constant dense<0.000000e+00> : vector<128x128xf32>
    %9 = tpu.matmul %1, %8, %cst {dimension_numbers = #tpu.dot_dimension_numbers<[1], [0], [0], [1], [0, 0, 1, 1], [], []>} : vector<128x512xbf16>, vector<512x128xbf16>, vector<128x128xf32> -> vector<128x128xf32>
    %10 = vector.broadcast %2 : vector<1x128xf32> to vector<128x128xf32>
    %11 = arith.addf %9, %10 : vector<128x128xf32>
    %cst_9 = arith.constant 5.000000e-01 : f32
    %12 = vector.broadcast %cst_9 : f32 to vector<128x128xf32>
    %13 = arith.mulf %12, %11 : vector<128x128xf32>
    %14 = math.tanh %13 : vector<128x128xf32>
    %cst_10 = arith.constant 5.000000e-01 : f32
    %15 = vector.broadcast %cst_10 : f32 to vector<128x128xf32>
    %16 = arith.mulf %15, %14 : vector<128x128xf32>
    %cst_11 = arith.constant 5.000000e-01 : f32
    %17 = vector.broadcast %cst_11 : f32 to vector<128x128xf32>
    %18 = arith.addf %16, %17 : vector<128x128xf32>
    %19 = arith.truncf %18 : vector<128x128xf32> to vector<128x128xbf16>
    %c0_12 = arith.constant 0 : index
    %c0_13 = arith.constant 0 : index
    %20 = vector.load %arg3[%c0_12, %c0_13] : memref<128x128xbf16, #tpu.memory_space<vmem>>, vector<128x128xbf16>
    %cst_14 = arith.constant dense<0.000000e+00> : vector<128x128xf32>
    %21 = tpu.matmul %19, %20, %cst_14 {dimension_numbers = #tpu.dot_dimension_numbers<[1], [0], [0], [1], [0, 0, 1, 1], [], []>} : vector<128x128xbf16>, vector<128x128xbf16>, vector<128x128xf32> -> vector<128x128xf32>
    %22 = vector.broadcast %3 : vector<1x128xf32> to vector<128x128xf32>
    %23 = arith.addf %21, %22 : vector<128x128xf32>
    %cst_15 = arith.constant 5.000000e-01 : f32
    %24 = vector.broadcast %cst_15 : f32 to vector<128x128xf32>
    %25 = arith.mulf %24, %23 : vector<128x128xf32>
    %26 = math.tanh %25 : vector<128x128xf32>
    %cst_16 = arith.constant 5.000000e-01 : f32
    %27 = vector.broadcast %cst_16 : f32 to vector<128x128xf32>
    %28 = arith.mulf %27, %26 : vector<128x128xf32>
    %cst_17 = arith.constant 5.000000e-01 : f32
    %29 = vector.broadcast %cst_17 : f32 to vector<128x128xf32>
    %30 = arith.addf %28, %29 : vector<128x128xf32>
    %31 = arith.truncf %30 : vector<128x128xf32> to vector<128x128xbf16>
    %c0_18 = arith.constant 0 : index
    %c0_19 = arith.constant 0 : index
    %32 = vector.load %arg4[%c0_18, %c0_19] : memref<128x128xbf16, #tpu.memory_space<vmem>>, vector<128x128xbf16>
    %cst_20 = arith.constant dense<0.000000e+00> : vector<128x128xf32>
    %33 = tpu.matmul %31, %32, %cst_20 {dimension_numbers = #tpu.dot_dimension_numbers<[1], [0], [0], [1], [0, 0, 1, 1], [], []>} : vector<128x128xbf16>, vector<128x128xbf16>, vector<128x128xf32> -> vector<128x128xf32>
    %34 = vector.broadcast %4 : vector<1x128xf32> to vector<128x128xf32>
    %35 = arith.addf %33, %34 : vector<128x128xf32>
    %cst_21 = arith.constant 5.000000e-01 : f32
    %36 = vector.broadcast %cst_21 : f32 to vector<128x128xf32>
    %37 = arith.mulf %36, %35 : vector<128x128xf32>
    %38 = math.tanh %37 : vector<128x128xf32>
    %cst_22 = arith.constant 5.000000e-01 : f32
    %39 = vector.broadcast %cst_22 : f32 to vector<128x128xf32>
    %40 = arith.mulf %39, %38 : vector<128x128xf32>
    %cst_23 = arith.constant 5.000000e-01 : f32
    %41 = vector.broadcast %cst_23 : f32 to vector<128x128xf32>
    %42 = arith.addf %40, %41 : vector<128x128xf32>
    %43 = vector.shape_cast %42 : vector<128x128xf32> to vector<1x128x128xf32>
    %44 = vector.broadcast %7 : vector<1x1x128xf32> to vector<1x128x128xf32>
    %45 = arith.mulf %43, %44 : vector<1x128x128xf32>
    %cst_24 = arith.constant dense<0.000000e+00> : vector<1x128xf32>
    %46 = vector.multi_reduction <add>, %45, %cst_24 [2] : vector<1x128x128xf32> to vector<1x128xf32>
    %47 = arith.addf %46, %5 : vector<1x128xf32>
    %c0_25 = arith.constant 0 : index
    %c0_26 = arith.constant 0 : index
    %c0_27 = arith.constant 0 : index
    %48 = vector.load %arg6[%c0_25, %c0_26, %c0_27] : memref<1x1x128xf32, #tpu.memory_space<vmem>>, vector<1x1x128xf32>
    %49 = vector.shape_cast %48 : vector<1x1x128xf32> to vector<1x128xf32>
    %50 = vector.shape_cast %47 : vector<1x128xf32> to vector<1x1x128xf32>
    tpu.vector_store %arg6[%c0_25, %c0_26, %c0_27], %50 {strides = array<i32>} : memref<1x1x128xf32, #tpu.memory_space<vmem>>, vector<1x1x128xf32>,
    return
  }
  func.func @transform_0(%arg0: i32) -> (i32, i32) {
    %c0_i32 = arith.constant 0 : i32
    %c0_i32_0 = arith.constant 0 : i32
    return %arg0, %c0_i32 : i32, i32
  }
  func.func @transform_1(%arg0: i32) -> (i32, i32) {
    %c0_i32 = arith.constant 0 : i32
    %c0_i32_0 = arith.constant 0 : i32
    %c0_i32_1 = arith.constant 0 : i32
    return %c0_i32, %c0_i32_0 : i32, i32
  }
  func.func @transform_2(%arg0: i32) -> (i32, i32) {
    %c0_i32 = arith.constant 0 : i32
    %c0_i32_0 = arith.constant 0 : i32
    %c0_i32_1 = arith.constant 0 : i32
    return %c0_i32, %c0_i32_0 : i32, i32
  }
  func.func @transform_3(%arg0: i32) -> (i32, i32) {
    %c0_i32 = arith.constant 0 : i32
    %c0_i32_0 = arith.constant 0 : i32
    %c0_i32_1 = arith.constant 0 : i32
    return %c0_i32, %c0_i32_0 : i32, i32
  }
  func.func @transform_4(%arg0: i32) -> (i32, i32) {
    %c0_i32 = arith.constant 0 : i32
    %c0_i32_0 = arith.constant 0 : i32
    %c0_i32_1 = arith.constant 0 : i32
    return %c0_i32, %c0_i32_0 : i32, i32
  }
  func.func @transform_5(%arg0: i32) -> (i32, i32, i32) {
    %c0_i32 = arith.constant 0 : i32
    %c0_i32_0 = arith.constant 0 : i32
    %c0_i32_1 = arith.constant 0 : i32
    return %arg0, %c0_i32, %c0_i32_0 : i32, i32, i32
  }
}

</mosaic_0001>

<llo_original>
// kernel: dense3_forward.1
$region0: #{dense3_forward.1}
  #allocation0 [shape = 'u32[]', space=smem, size = 0x4, offset = 0x4, fixed_abs, tag = 'smem constant byte address 0x4 - core index']
  #allocation1 [shape = 'u32[144,128]{1,0:T(1,128)}', space=vmem, size = 0x12000, scoped, tag = 'internal scratch']
  %s0 = inlined_call_operand.hbm [shape: f32[8,512], index: 0, kind: input, shape index: {}]
  %s1 = inlined_call_operand.hbm [shape: bf16[512,128], index: 1, kind: input, shape index: {}]
  %s2 = inlined_call_operand.hbm [shape: bf16[128,128], index: 2, kind: input, shape index: {}]
  %s3 = inlined_call_operand.hbm [shape: bf16[128,128], index: 3, kind: input, shape index: {}]
  %s4 = inlined_call_operand.hbm [shape: f32[5,128], index: 4, kind: input, shape index: {}]
  %s5 = inlined_call_operand.vmem [shape: f32[1,1,128], index: 5, kind: output, shape index: {}]
  %s6 = sld [smem:[#allocation0]]
  $region50: #{dense3_forward.1} parent=0
    _
  %s8 = ssub.s32 1, %s6
  %s9 = scalar_select 0, %s8, %s6
  $region1: #{dense3_forward.1} parent=0
    #allocation2 [shape = 'u8[262144]{0}', space=vmem, size = 0x40000, scoped, tag = 'input window, operand 0, single buffered']
    #allocation3 [shape = 's32[1]{0}', space=sflag, size = 0x4, scoped, tag = 'scoped memory for dense3_forward.1']
    #allocation4 [shape = 'u8[131072]{0}', space=vmem, size = 0x20000, scoped, tag = 'input window, operand 1, single buffered']
    #allocation5 [shape = 's32[1]{0}', space=sflag, size = 0x4, scoped, tag = 'scoped memory for dense3_forward.1']
    #allocation6 [shape = 'u8[32768]{0}', space=vmem, size = 0x8000, scoped, tag = 'input window, operand 2, single buffered']
    #allocation7 [shape = 'u8[32768]{0}', space=vmem, size = 0x8000, scoped, tag = 'input window, operand 3, single buffered']
    #allocation8 [shape = 's32[1]{0}', space=sflag, size = 0x4, scoped, tag = 'scoped memory for dense3_forward.1']
    #allocation9 [shape = 'u8[4096]{0}', space=vmem, size = 0x1000, scoped, tag = 'input window, operand 4, single buffered']
    %10 = vsyncpa [#allocation3], 0
    %11 = vsyncpa [#allocation5], 0
    %12 = vsyncpa [#allocation8], 0
    // Predicated region
    $region2: #{dense3_forward.1} parent=1 // pred_check
      _
    $region3: #{dense3_forward.1} parent=1 // pred_check_branch
      %14 = sbr.rel (0) target = $region5
    $region4: #{dense3_forward.1} parent=1 // pred_region
      %s16 = ssub.s32 8192, 512
      %17 = vsyncadd [#allocation3], %s16
      %s18 = sshll.u32 [#allocation2], 4
      %s19 = int_to_ptr.vmem [resolvable:$true] %s18
      %24 = dma.hbm_to_vmem [thread:$0]  %s0, 512, %s19, [#allocation3], 512, 512, 32
    $region5: #{dense3_forward.1} parent=1 // pred_fallthru
      _
    // Predicated region
    $region6: #{dense3_forward.1} parent=1 // pred_check
      _
    $region7: #{dense3_forward.1} parent=1 // pred_check_branch
      %26 = sbr.rel (0) target = $region9
    $region8: #{dense3_forward.1} parent=1 // pred_region
      %s28 = ssub.s32 4096, 4096
      %29 = vsyncadd [#allocation5], %s28
      %s30 = sshll.u32 [#allocation4], 4
      %s31 = int_to_ptr.vmem [resolvable:$true] %s30
      %36 = dma.hbm_to_vmem [thread:$0]  %s1, 4096, %s31, [#allocation5], 64, 64, 4
    $region9: #{dense3_forward.1} parent=1 // pred_fallthru
      _
    // Predicated region
    $region10: #{dense3_forward.1} parent=1 // pred_check
      _
    $region11: #{dense3_forward.1} parent=1 // pred_check_branch
      %38 = sbr.rel (0) target = $region13
    $region12: #{dense3_forward.1} parent=1 // pred_region
      %s40 = ssub.s32 1024, 1024
      %41 = vsyncadd [#allocation5], %s40
      %s42 = sshll.u32 [#allocation6], 4
      %s43 = int_to_ptr.vmem [resolvable:$true] %s42
      %48 = dma.hbm_to_vmem [thread:$0]  %s2, 1024, %s43, [#allocation5], 64, 64, 4
    $region13: #{dense3_forward.1} parent=1 // pred_fallthru
      _
    // Predicated region
    $region14: #{dense3_forward.1} parent=1 // pred_check
      _
    $region15: #{dense3_forward.1} parent=1 // pred_check_branch
      %50 = sbr.rel (0) target = $region17
    $region16: #{dense3_forward.1} parent=1 // pred_region
      %s52 = ssub.s32 1024, 1024
      %53 = vsyncadd [#allocation8], %s52
      %s54 = sshll.u32 [#allocation7], 4
      %s55 = int_to_ptr.vmem [resolvable:$true] %s54
      %60 = dma.hbm_to_vmem [thread:$0]  %s3, 1024, %s55, [#allocation8], 64, 64, 4
    $region17: #{dense3_forward.1} parent=1 // pred_fallthru
      _
    // Predicated region
    $region18: #{dense3_forward.1} parent=1 // pred_check
      _
    $region19: #{dense3_forward.1} parent=1 // pred_check_branch
      %62 = sbr.rel (0) target = $region21
    $region20: #{dense3_forward.1} parent=1 // pred_region
      %s64 = ssub.s32 128, 128
      %65 = vsyncadd [#allocation8], %s64
      %s67 = sshll.u32 [#allocation9], 4
      %s68 = int_to_ptr.vmem [resolvable:$true] %s67
      %70 = dma.hbm_to_vmem [thread:$0]  %s4, 128, %s68, [#allocation8]
    $region21: #{dense3_forward.1} parent=1 // pred_fallthru
      _
    // Predicated region
    $region22: #{dense3_forward.1} parent=1 // pred_check
      _
    $region23: #{dense3_forward.1} parent=1 // pred_check_branch
      %72 = sbr.rel (0) target = $region25
    $region24: #{dense3_forward.1} parent=1 // pred_region
      %73 = dma.done [#allocation3], 8192
    $region25: #{dense3_forward.1} parent=1 // pred_fallthru
      _
    // Predicated region
    $region26: #{dense3_forward.1} parent=1 // pred_check
      _
    $region27: #{dense3_forward.1} parent=1 // pred_check_branch
      %75 = sbr.rel (0) target = $region29
    $region28: #{dense3_forward.1} parent=1 // pred_region
      %76 = dma.done [#allocation5], 4096
    $region29: #{dense3_forward.1} parent=1 // pred_fallthru
      _
    // Predicated region
    $region30: #{dense3_forward.1} parent=1 // pred_check
      _
    $region31: #{dense3_forward.1} parent=1 // pred_check_branch
      %78 = sbr.rel (0) target = $region33
    $region32: #{dense3_forward.1} parent=1 // pred_region
      %79 = dma.done [#allocation5], 1024
    $region33: #{dense3_forward.1} parent=1 // pred_fallthru
      _
    // Predicated region
    $region34: #{dense3_forward.1} parent=1 // pred_check
      _
    $region35: #{dense3_forward.1} parent=1 // pred_check_branch
      %81 = sbr.rel (0) target = $region37
    $region36: #{dense3_forward.1} parent=1 // pred_region
      %82 = dma.done [#allocation8], 1024
    $region37: #{dense3_forward.1} parent=1 // pred_fallthru
      _
    // Predicated region
    $region38: #{dense3_forward.1} parent=1 // pred_check
      _
    $region39: #{dense3_forward.1} parent=1 // pred_check_branch
      %84 = sbr.rel (0) target = $region41
    $region40: #{dense3_forward.1} parent=1 // pred_region
      %85 = dma.done [#allocation8], 128
    $region41: #{dense3_forward.1} parent=1 // pred_fallthru
      _
    %v87 = vld [vmem:[#allocation2] sm:$0xff]
    %v88 = vld [vmem:[#allocation2 + $0x8] sm:$0xff]
    %v89 = vld [vmem:[#allocation2 + $0x10] sm:$0xff]
    %v90 = vld [vmem:[#allocation2 + $0x18] sm:$0xff]
    %v91 = vld [vmem:[#allocation2 + $0x20] sm:$0xff]
    %v92 = vld [vmem:[#allocation2 + $0x28] sm:$0xff]
    %v93 = vld [vmem:[#allocation2 + $0x30] sm:$0xff]
    %v94 = vld [vmem:[#allocation2 + $0x38] sm:$0xff]
    %v95 = vld [vmem:[#allocation2 + $0x40] sm:$0xff]
    %v96 = vld [vmem:[#allocation2 + $0x48] sm:$0xff]
    %v97 = vld [vmem:[#allocation2 + $0x50] sm:$0xff]
    %v98 = vld [vmem:[#allocation2 + $0x58] sm:$0xff]
    %v99 = vld [vmem:[#allocation2 + $0x60] sm:$0xff]
    %v100 = vld [vmem:[#allocation2 + $0x68] sm:$0xff]
    %v101 = vld [vmem:[#allocation2 + $0x70] sm:$0xff]
    %v102 = vld [vmem:[#allocation2 + $0x78] sm:$0xff]
    %v103 = vld [vmem:[#allocation2 + $0x80] sm:$0xff]
    %v104 = vld [vmem:[#allocation2 + $0x88] sm:$0xff]
    %v105 = vld [vmem:[#allocation2 + $0x90] sm:$0xff]
    %v106 = vld [vmem:[#allocation2 + $0x98] sm:$0xff]
    %v107 = vld [vmem:[#allocation2 + $0xa0] sm:$0xff]
    %v108 = vld [vmem:[#allocation2 + $0xa8] sm:$0xff]
    %v109 = vld [vmem:[#allocation2 + $0xb0] sm:$0xff]
    %v110 = vld [vmem:[#allocation2 + $0xb8] sm:$0xff]
    %v111 = vld [vmem:[#allocation2 + $0xc0] sm:$0xff]
    %v112 = vld [vmem:[#allocation2 + $0xc8] sm:$0xff]
    %v113 = vld [vmem:[#allocation2 + $0xd0] sm:$0xff]
    %v114 = vld [vmem:[#allocation2 + $0xd8] sm:$0xff]
    %v115 = vld [vmem:[#allocation2 + $0xe0] sm:$0xff]
    %v116 = vld [vmem:[#allocation2 + $0xe8] sm:$0xff]
    %v117 = vld [vmem:[#allocation2 + $0xf0] sm:$0xff]
    %v118 = vld [vmem:[#allocation2 + $0xf8] sm:$0xff]
    %v119 = vld [vmem:[#allocation2 + $0x100] sm:$0xff]
    %v120 = vld [vmem:[#allocation2 + $0x108] sm:$0xff]
    %v121 = vld [vmem:[#allocation2 + $0x110] sm:$0xff]
    %v122 = vld [vmem:[#allocation2 + $0x118] sm:$0xff]
    %v123 = vld [vmem:[#allocation2 + $0x120] sm:$0xff]
    %v124 = vld [vmem:[#allocation2 + $0x128] sm:$0xff]
    %v125 = vld [vmem:[#allocation2 + $0x130] sm:$0xff]
    %v126 = vld [vmem:[#allocation2 + $0x138] sm:$0xff]
    %v127 = vld [vmem:[#allocation2 + $0x140] sm:$0xff]
    %v128 = vld [vmem:[#allocation2 + $0x148] sm:$0xff]
    %v129 = vld [vmem:[#allocation2 + $0x150] sm:$0xff]
    %v130 = vld [vmem:[#allocation2 + $0x158] sm:$0xff]
    %v131 = vld [vmem:[#allocation2 + $0x160] sm:$0xff]
    %v132 = vld [vmem:[#allocation2 + $0x168] sm:$0xff]
    %v133 = vld [vmem:[#allocation2 + $0x170] sm:$0xff]
    %v134 = vld [vmem:[#allocation2 + $0x178] sm:$0xff]
    %v135 = vld [vmem:[#allocation2 + $0x180] sm:$0xff]
    %v136 = vld [vmem:[#allocation2 + $0x188] sm:$0xff]
    %v137 = vld [vmem:[#allocation2 + $0x190] sm:$0xff]
    %v138 = vld [vmem:[#allocation2 + $0x198] sm:$0xff]
    %v139 = vld [vmem:[#allocation2 + $0x1a0] sm:$0xff]
    %v140 = vld [vmem:[#allocation2 + $0x1a8] sm:$0xff]
    %v141 = vld [vmem:[#allocation2 + $0x1b0] sm:$0xff]
    %v142 = vld [vmem:[#allocation2 + $0x1b8] sm:$0xff]
    %v143 = vld [vmem:[#allocation2 + $0x1c0] sm:$0xff]
    %v144 = vld [vmem:[#allocation2 + $0x1c8] sm:$0xff]
    %v145 = vld [vmem:[#allocation2 + $0x1d0] sm:$0xff]
    %v146 = vld [vmem:[#allocation2 + $0x1d8] sm:$0xff]
    %v147 = vld [vmem:[#allocation2 + $0x1e0] sm:$0xff]
    %v148 = vld [vmem:[#allocation2 + $0x1e8] sm:$0xff]
    %v149 = vld [vmem:[#allocation2 + $0x1f0] sm:$0xff]
    %v150 = vld [vmem:[#allocation2 + $0x1f8] sm:$0xff]
    %v151 = vpack.c.bf16 %v91, %v87
    %v152 = vpack.c.bf16 %v92, %v88
    %v153 = vpack.c.bf16 %v93, %v89
    %v154 = vpack.c.bf16 %v94, %v90
    %v155 = vpack.c.bf16 %v99, %v95
    %v156 = vpack.c.bf16 %v100, %v96
    %v157 = vpack.c.bf16 %v101, %v97
    %v158 = vpack.c.bf16 %v102, %v98
    %v159 = vpack.c.bf16 %v107, %v103
    %v160 = vpack.c.bf16 %v108, %v104
    %v161 = vpack.c.bf16 %v109, %v105
    %v162 = vpack.c.bf16 %v110, %v106
    %v163 = vpack.c.bf16 %v115, %v111
    %v164 = vpack.c.bf16 %v116, %v112
    %v165 = vpack.c.bf16 %v117, %v113
    %v166 = vpack.c.bf16 %v118, %v114
    %v167 = vpack.c.bf16 %v123, %v119
    %v168 = vpack.c.bf16 %v124, %v120
    %v169 = vpack.c.bf16 %v125, %v121
    %v170 = vpack.c.bf16 %v126, %v122
    %v171 = vpack.c.bf16 %v131, %v127
    %v172 = vpack.c.bf16 %v132, %v128
    %v173 = vpack.c.bf16 %v133, %v129
    %v174 = vpack.c.bf16 %v134, %v130
    %v175 = vpack.c.bf16 %v139, %v135
    %v176 = vpack.c.bf16 %v140, %v136
    %v177 = vpack.c.bf16 %v141, %v137
    %v178 = vpack.c.bf16 %v142, %v138
    %v179 = vpack.c.bf16 %v147, %v143
    %v180 = vpack.c.bf16 %v148, %v144
    %v181 = vpack.c.bf16 %v149, %v145
    %v182 = vpack.c.bf16 %v150, %v146
    %v183 = vld [vmem:[#allocation9] sm:$0x1]
    %v184 = vld [vmem:[#allocation9 + $0x1] sm:$0x1]
    %v185 = vld [vmem:[#allocation9 + $0x2] sm:$0x1]
    %v186 = vld [vmem:[#allocation9 + $0x3] sm:$0x1]
    %v187 = vld [vmem:[#allocation9 + $0x4] sm:$0x1]
    %v188 = vld [vmem:[#allocation4] sm:$0xf]
    %v189 = vld [vmem:[#allocation4 + $0x4] sm:$0xf]
    %v190 = vld [vmem:[#allocation4 + $0x8] sm:$0xf]
    %v191 = vld [vmem:[#allocation4 + $0xc] sm:$0xf]
    %v192 = vld [vmem:[#allocation4 + $0x10] sm:$0xf]
    %v193 = vld [vmem:[#allocation4 + $0x14] sm:$0xf]
    %v194 = vld [vmem:[#allocation4 + $0x18] sm:$0xf]
    %v195 = vld [vmem:[#allocation4 + $0x1c] sm:$0xf]
    %v196 = vld [vmem:[#allocation4 + $0x20] sm:$0xf]
    %v197 = vld [vmem:[#allocation4 + $0x24] sm:$0xf]
    %v198 = vld [vmem:[#allocation4 + $0x28] sm:$0xf]
    %v199 = vld [vmem:[#allocation4 + $0x2c] sm:$0xf]
    %v200 = vld [vmem:[#allocation4 + $0x30] sm:$0xf]
    %v201 = vld [vmem:[#allocation4 + $0x34] sm:$0xf]
    %v202 = vld [vmem:[#allocation4 + $0x38] sm:$0xf]
    %v203 = vld [vmem:[#allocation4 + $0x3c] sm:$0xf]
    %v204 = vld [vmem:[#allocation4 + $0x40] sm:$0xf]
    %v205 = vld [vmem:[#allocation4 + $0x44] sm:$0xf]
    %v206 = vld [vmem:[#allocation4 + $0x48] sm:$0xf]
    %v207 = vld [vmem:[#allocation4 + $0x4c] sm:$0xf]
    %v208 = vld [vmem:[#allocation4 + $0x50] sm:$0xf]
    %v209 = vld [vmem:[#allocation4 + $0x54] sm:$0xf]
    %v210 = vld [vmem:[#allocation4 + $0x58] sm:$0xf]
    %v211 = vld [vmem:[#allocation4 + $0x5c] sm:$0xf]
    %v212 = vld [vmem:[#allocation4 + $0x60] sm:$0xf]
    %v213 = vld [vmem:[#allocation4 + $0x64] sm:$0xf]
    %v214 = vld [vmem:[#allocation4 + $0x68] sm:$0xf]
    %v215 = vld [vmem:[#allocation4 + $0x6c] sm:$0xf]
    %v216 = vld [vmem:[#allocation4 + $0x70] sm:$0xf]
    %v217 = vld [vmem:[#allocation4 + $0x74] sm:$0xf]
    %v218 = vld [vmem:[#allocation4 + $0x78] sm:$0xf]
    %v219 = vld [vmem:[#allocation4 + $0x7c] sm:$0xf]
    %v220 = vld [vmem:[#allocation4 + $0x80] sm:$0xf]
    %v221 = vld [vmem:[#allocation4 + $0x84] sm:$0xf]
    %v222 = vld [vmem:[#allocation4 + $0x88] sm:$0xf]
    %v223 = vld [vmem:[#allocation4 + $0x8c] sm:$0xf]
    %v224 = vld [vmem:[#allocation4 + $0x90] sm:$0xf]
    %v225 = vld [vmem:[#allocation4 + $0x94] sm:$0xf]
    %v226 = vld [vmem:[#allocation4 + $0x98] sm:$0xf]
    %v227 = vld [vmem:[#allocation4 + $0x9c] sm:$0xf]
    %v228 = vld [vmem:[#allocation4 + $0xa0] sm:$0xf]
    %v229 = vld [vmem:[#allocation4 + $0xa4] sm:$0xf]
    %v230 = vld [vmem:[#allocation4 + $0xa8] sm:$0xf]
    %v231 = vld [vmem:[#allocation4 + $0xac] sm:$0xf]
    %v232 = vld [vmem:[#allocation4 + $0xb0] sm:$0xf]
    %v233 = vld [vmem:[#allocation4 + $0xb4] sm:$0xf]
    %v234 = vld [vmem:[#allocation4 + $0xb8] sm:$0xf]
    %v235 = vld [vmem:[#allocation4 + $0xbc] sm:$0xf]
    %v236 = vld [vmem:[#allocation4 + $0xc0] sm:$0xf]
    %v237 = vld [vmem:[#allocation4 + $0xc4] sm:$0xf]
    %v238 = vld [vmem:[#allocation4 + $0xc8] sm:$0xf]
    %v239 = vld [vmem:[#allocation4 + $0xcc] sm:$0xf]
    %v240 = vld [vmem:[#allocation4 + $0xd0] sm:$0xf]
    %v241 = vld [vmem:[#allocation4 + $0xd4] sm:$0xf]
    %v242 = vld [vmem:[#allocation4 + $0xd8] sm:$0xf]
    %v243 = vld [vmem:[#allocation4 + $0xdc] sm:$0xf]
    %v244 = vld [vmem:[#allocation4 + $0xe0] sm:$0xf]
    %v245 = vld [vmem:[#allocation4 + $0xe4] sm:$0xf]
    %v246 = vld [vmem:[#allocation4 + $0xe8] sm:$0xf]
    %v247 = vld [vmem:[#allocation4 + $0xec] sm:$0xf]
    %v248 = vld [vmem:[#allocation4 + $0xf0] sm:$0xf]
    %v249 = vld [vmem:[#allocation4 + $0xf4] sm:$0xf]
    %v250 = vld [vmem:[#allocation4 + $0xf8] sm:$0xf]
    %v251 = vld [vmem:[#allocation4 + $0xfc] sm:$0xf]
    %v252 = vlaneseq
    %v253 = vshrl.u32 %v252, 7
    %v254 = vsub.s32 0, %v253
    %v255 = vrot.slane %v183, %v254
    %v320 = vunpack.c.l.b16 %v188
    %v321 = vunpack.c.l.b16 %v189
    %v322 = vunpack.c.l.b16 %v190
    %v323 = vunpack.c.l.b16 %v191
    %v324 = vunpack.c.l.b16 %v192
    %v325 = vunpack.c.l.b16 %v193
    %v326 = vunpack.c.l.b16 %v194
    %v327 = vunpack.c.l.b16 %v195
    %v328 = vunpack.c.l.b16 %v196
    %v329 = vunpack.c.l.b16 %v197
    %v330 = vunpack.c.l.b16 %v198
    %v331 = vunpack.c.l.b16 %v199
    %v332 = vunpack.c.l.b16 %v200
    %v333 = vunpack.c.l.b16 %v201
    %v334 = vunpack.c.l.b16 %v202
    %v335 = vunpack.c.l.b16 %v203
    %v336 = vunpack.c.l.b16 %v204
    %v337 = vunpack.c.l.b16 %v205
    %v338 = vunpack.c.l.b16 %v206
    %v339 = vunpack.c.l.b16 %v207
    %v340 = vunpack.c.l.b16 %v208
    %v341 = vunpack.c.l.b16 %v209
    %v342 = vunpack.c.l.b16 %v210
    %v343 = vunpack.c.l.b16 %v211
    %v344 = vunpack.c.l.b16 %v212
    %v345 = vunpack.c.l.b16 %v213
    %v346 = vunpack.c.l.b16 %v214
    %v347 = vunpack.c.l.b16 %v215
    %v348 = vunpack.c.l.b16 %v216
    %v349 = vunpack.c.l.b16 %v217
    %v350 = vunpack.c.l.b16 %v218
    %v351 = vunpack.c.l.b16 %v219
    %v352 = vunpack.c.l.b16 %v220
    %v353 = vunpack.c.l.b16 %v221
    %v354 = vunpack.c.l.b16 %v222
    %v355 = vunpack.c.l.b16 %v223
    %v356 = vunpack.c.l.b16 %v224
    %v357 = vunpack.c.l.b16 %v225
    %v358 = vunpack.c.l.b16 %v226
    %v359 = vunpack.c.l.b16 %v227
    %v360 = vunpack.c.l.b16 %v228
    %v361 = vunpack.c.l.b16 %v229
    %v362 = vunpack.c.l.b16 %v230
    %v363 = vunpack.c.l.b16 %v231
    %v364 = vunpack.c.l.b16 %v232
    %v365 = vunpack.c.l.b16 %v233
    %v366 = vunpack.c.l.b16 %v234
    %v367 = vunpack.c.l.b16 %v235
    %v368 = vunpack.c.l.b16 %v236
    %v369 = vunpack.c.l.b16 %v237
    %v370 = vunpack.c.l.b16 %v238
    %v371 = vunpack.c.l.b16 %v239
    %v372 = vunpack.c.l.b16 %v240
    %v373 = vunpack.c.l.b16 %v241
    %v374 = vunpack.c.l.b16 %v242
    %v375 = vunpack.c.l.b16 %v243
    %v376 = vunpack.c.l.b16 %v244
    %v377 = vunpack.c.l.b16 %v245
    %v378 = vunpack.c.l.b16 %v246
    %v379 = vunpack.c.l.b16 %v247
    %v380 = vunpack.c.l.b16 %v248
    %v381 = vunpack.c.l.b16 %v249
    %v382 = vunpack.c.l.b16 %v250
    %v383 = vunpack.c.l.b16 %v251
    %v384 = vpack.c.b16 %v321, %v320
    %v385 = vpack.c.b16 %v323, %v322
    %v386 = vpack.c.b16 %v325, %v324
    %v387 = vpack.c.b16 %v327, %v326
    %v388 = vpack.c.b16 %v329, %v328
    %v389 = vpack.c.b16 %v331, %v330
    %v390 = vpack.c.b16 %v333, %v332
    %v391 = vpack.c.b16 %v335, %v334
    %v392 = vpack.c.b16 %v337, %v336
    %v393 = vpack.c.b16 %v339, %v338
    %v394 = vpack.c.b16 %v341, %v340
    %v395 = vpack.c.b16 %v343, %v342
    %v396 = vpack.c.b16 %v345, %v344
    %v397 = vpack.c.b16 %v347, %v346
    %v398 = vpack.c.b16 %v349, %v348
    %v399 = vpack.c.b16 %v351, %v350
    %v400 = vpack.c.b16 %v353, %v352
    %v401 = vpack.c.b16 %v355, %v354
    %v402 = vpack.c.b16 %v357, %v356
    %v403 = vpack.c.b16 %v359, %v358
    %v404 = vpack.c.b16 %v361, %v360
    %v405 = vpack.c.b16 %v363, %v362
    %v406 = vpack.c.b16 %v365, %v364
    %v407 = vpack.c.b16 %v367, %v366
    %v408 = vpack.c.b16 %v369, %v368
    %v409 = vpack.c.b16 %v371, %v370
    %v410 = vpack.c.b16 %v373, %v372
    %v411 = vpack.c.b16 %v375, %v374
    %v412 = vpack.c.b16 %v377, %v376
    %v413 = vpack.c.b16 %v379, %v378
    %v414 = vpack.c.b16 %v381, %v380
    %v415 = vpack.c.b16 %v383, %v382
    %448 = vmatprep.subr.bf16.mxu0 0
    %449 = vmatpush1.bf16.msra.mxu0 %v391
    %450 = vmatprep.subr.bf16.mxu0 0
    %451 = vmatpush1.bf16.msra.mxu0 %v390
    %452 = vmatprep.subr.bf16.mxu0 0
    %453 = vmatpush1.bf16.msra.mxu0 %v389
    %454 = vmatprep.subr.bf16.mxu0 0
    %455 = vmatpush1.bf16.msra.mxu0 %v388
    %456 = vmatprep.subr.bf16.mxu0 0
    %457 = vmatpush1.bf16.msra.mxu0 %v387
    %458 = vmatprep.subr.bf16.mxu0 0
    %459 = vmatpush1.bf16.msra.mxu0 %v386
    %460 = vmatprep.subr.bf16.mxu0 0
    %461 = vmatpush1.bf16.msra.mxu0 %v385
    %462 = vmatprep.subr.bf16.mxu0 0
    %463 = vmatpush1.bf16.msra.mxu0 %v384
    %464 = vmatprep.subr.bf16.mxu0 0
    %465 = vmatpush2.bf16.msra.mxu0 %v399
    %466 = vmatprep.subr.bf16.mxu0 0
    %467 = vmatpush2.bf16.msra.mxu0 %v398
    %468 = vmatprep.subr.bf16.mxu0 0
    %469 = vmatpush2.bf16.msra.mxu0 %v397
    %470 = vmatprep.subr.bf16.mxu0 0
    %471 = vmatpush2.bf16.msra.mxu0 %v396
    %472 = vmatprep.subr.bf16.mxu0 0
    %473 = vmatpush2.bf16.msra.mxu0 %v395
    %474 = vmatprep.subr.bf16.mxu0 0
    %475 = vmatpush2.bf16.msra.mxu0 %v394
    %476 = vmatprep.subr.bf16.mxu0 0
    %477 = vmatpush2.bf16.msra.mxu0 %v393
    %478 = vmatprep.subr.bf16.mxu0 0
    %479 = vmatpush2.bf16.msra.mxu0 %v392
    %480 = vmatprep.mubr.bf16.mxu0 %v152
    %481 = vmatmul.mubr.bf16.gmra.mxu0 %v151
    %v482 = vpop.f32.mrf.mxu0
    %v483 = vadd.f32 %v255, %v482
    %v484 = vpop.f32.mrf.mxu0
    %v485 = vpop.f32.mrf.mxu0
    %v486 = vadd.f32 %v255, %v485
    %v487 = vpop.f32.mrf.mxu0
    %488 = vmatprep.mubr.bf16.mxu0 %v156
    %489 = vmatmul.mubr.bf16.gmra.mxu0 %v155
    %v490 = vpop.f32.mrf.mxu0
    %v491 = vadd.f32 %v255, %v490
    %v492 = vpop.f32.mrf.mxu0
    %v493 = vpop.f32.mrf.mxu0
    %v494 = vadd.f32 %v255, %v493
    %v495 = vpop.f32.mrf.mxu0
    %496 = vmatprep.mubr.bf16.mxu0 %v160
    %497 = vmatmul.mubr.bf16.gmra.mxu0 %v159
    %v498 = vpop.f32.mrf.mxu0
    %v499 = vadd.f32 %v255, %v498
    %v500 = vpop.f32.mrf.mxu0
    %v501 = vpop.f32.mrf.mxu0
    %v502 = vadd.f32 %v255, %v501
    %v503 = vpop.f32.mrf.mxu0
    %504 = vmatprep.mubr.bf16.mxu0 %v164
    %505 = vmatmul.mubr.bf16.gmra.mxu0 %v163
    %v506 = vpop.f32.mrf.mxu0
    %v507 = vadd.f32 %v255, %v506
    %v508 = vpop.f32.mrf.mxu0
    %v509 = vpop.f32.mrf.mxu0
    %v510 = vadd.f32 %v255, %v509
    %v511 = vpop.f32.mrf.mxu0
    %512 = vmatprep.mubr.bf16.mxu0 %v168
    %513 = vmatmul.mubr.bf16.gmra.mxu0 %v167
    %v514 = vpop.f32.mrf.mxu0
    %v515 = vadd.f32 %v255, %v514
    %v516 = vpop.f32.mrf.mxu0
    %v517 = vpop.f32.mrf.mxu0
    %v518 = vadd.f32 %v255, %v517
    %v519 = vpop.f32.mrf.mxu0
    %520 = vmatprep.mubr.bf16.mxu0 %v172
    %521 = vmatmul.mubr.bf16.gmra.mxu0 %v171
    %v522 = vpop.f32.mrf.mxu0
    %v523 = vadd.f32 %v255, %v522
    %v524 = vpop.f32.mrf.mxu0
    %v525 = vpop.f32.mrf.mxu0
    %v526 = vadd.f32 %v255, %v525
    %v527 = vpop.f32.mrf.mxu0
    %528 = vmatprep.mubr.bf16.mxu0 %v176
    %529 = vmatmul.mubr.bf16.gmra.mxu0 %v175
    %v530 = vpop.f32.mrf.mxu0
    %v531 = vadd.f32 %v255, %v530
    %v532 = vpop.f32.mrf.mxu0
    %v533 = vpop.f32.mrf.mxu0
    %v534 = vadd.f32 %v255, %v533
    %v535 = vpop.f32.mrf.mxu0
    %536 = vmatprep.mubr.bf16.mxu0 %v180
    %537 = vmatmul.mubr.bf16.gmra.mxu0 %v179
    %v538 = vpop.f32.mrf.mxu0
    %v539 = vadd.f32 %v255, %v538
    %v540 = vpop.f32.mrf.mxu0
    %v541 = vpop.f32.mrf.mxu0
    %v542 = vadd.f32 %v255, %v541
    %v543 = vpop.f32.mrf.mxu0
    %544 = vdwg.mxu0
    %545 = vmatprep.subr.bf16.mxu0 0
    %546 = vmatpush1.bf16.msra.mxu0 %v407
    %547 = vmatprep.subr.bf16.mxu0 0
    %548 = vmatpush1.bf16.msra.mxu0 %v406
    %549 = vmatprep.subr.bf16.mxu0 0
    %550 = vmatpush1.bf16.msra.mxu0 %v405
    %551 = vmatprep.subr.bf16.mxu0 0
    %552 = vmatpush1.bf16.msra.mxu0 %v404
    %553 = vmatprep.subr.bf16.mxu0 0
    %554 = vmatpush1.bf16.msra.mxu0 %v403
    %555 = vmatprep.subr.bf16.mxu0 0
    %556 = vmatpush1.bf16.msra.mxu0 %v402
    %557 = vmatprep.subr.bf16.mxu0 0
    %558 = vmatpush1.bf16.msra.mxu0 %v401
    %559 = vmatprep.subr.bf16.mxu0 0
    %560 = vmatpush1.bf16.msra.mxu0 %v400
    %561 = vmatprep.subr.bf16.mxu0 0
    %562 = vmatpush2.bf16.msra.mxu0 %v415
    %563 = vmatprep.subr.bf16.mxu0 0
    %564 = vmatpush2.bf16.msra.mxu0 %v414
    %565 = vmatprep.subr.bf16.mxu0 0
    %566 = vmatpush2.bf16.msra.mxu0 %v413
    %567 = vmatprep.subr.bf16.mxu0 0
    %568 = vmatpush2.bf16.msra.mxu0 %v412
    %569 = vmatprep.subr.bf16.mxu0 0
    %570 = vmatpush2.bf16.msra.mxu0 %v411
    %571 = vmatprep.subr.bf16.mxu0 0
    %572 = vmatpush2.bf16.msra.mxu0 %v410
    %573 = vmatprep.subr.bf16.mxu0 0
    %574 = vmatpush2.bf16.msra.mxu0 %v409
    %575 = vmatprep.subr.bf16.mxu0 0
    %576 = vmatpush2.bf16.msra.mxu0 %v408
    %577 = vmatprep.mubr.bf16.mxu0 %v154
    %578 = vmatmul.mubr.bf16.gmra.mxu0 %v153
    %v579 = vpop.f32.mrf.mxu0
    %v580 = vadd.f32 %v483, %v579
    %v581 = vpop.f32.mrf.mxu0
    %v582 = vpop.f32.mrf.mxu0
    %v583 = vadd.f32 %v486, %v582
    %v584 = vpop.f32.mrf.mxu0
    %585 = vmatprep.mubr.bf16.mxu0 %v158
    %586 = vmatmul.mubr.bf16.gmra.mxu0 %v157
    %v587 = vpop.f32.mrf.mxu0
    %v588 = vadd.f32 %v491, %v587
    %v589 = vpop.f32.mrf.mxu0
    %v590 = vpop.f32.mrf.mxu0
    %v591 = vadd.f32 %v494, %v590
    %v592 = vpop.f32.mrf.mxu0
    %593 = vmatprep.mubr.bf16.mxu0 %v162
    %594 = vmatmul.mubr.bf16.gmra.mxu0 %v161
    %v595 = vpop.f32.mrf.mxu0
    %v596 = vadd.f32 %v499, %v595
    %v597 = vpop.f32.mrf.mxu0
    %v598 = vpop.f32.mrf.mxu0
    %v599 = vadd.f32 %v502, %v598
    %v600 = vpop.f32.mrf.mxu0
    %601 = vmatprep.mubr.bf16.mxu0 %v166
    %602 = vmatmul.mubr.bf16.gmra.mxu0 %v165
    %v603 = vpop.f32.mrf.mxu0
    %v604 = vadd.f32 %v507, %v603
    %v605 = vpop.f32.mrf.mxu0
    %v606 = vpop.f32.mrf.mxu0
    %v607 = vadd.f32 %v510, %v606
    %v608 = vpop.f32.mrf.mxu0
    %609 = vmatprep.mubr.bf16.mxu0 %v170
    %610 = vmatmul.mubr.bf16.gmra.mxu0 %v169
    %v611 = vpop.f32.mrf.mxu0
    %v612 = vadd.f32 %v515, %v611
    %v613 = vpop.f32.mrf.mxu0
    %v614 = vpop.f32.mrf.mxu0
    %v615 = vadd.f32 %v518, %v614
    %v616 = vpop.f32.mrf.mxu0
    %617 = vmatprep.mubr.bf16.mxu0 %v174
    %618 = vmatmul.mubr.bf16.gmra.mxu0 %v173
    %v619 = vpop.f32.mrf.mxu0
    %v620 = vadd.f32 %v523, %v619
    %v621 = vpop.f32.mrf.mxu0
    %v622 = vpop.f32.mrf.mxu0
    %v623 = vadd.f32 %v526, %v622
    %v624 = vpop.f32.mrf.mxu0
    %625 = vmatprep.mubr.bf16.mxu0 %v178
    %626 = vmatmul.mubr.bf16.gmra.mxu0 %v177
    %v627 = vpop.f32.mrf.mxu0
    %v628 = vadd.f32 %v531, %v627
    %v629 = vpop.f32.mrf.mxu0
    %v630 = vpop.f32.mrf.mxu0
    %v631 = vadd.f32 %v534, %v630
    %v632 = vpop.f32.mrf.mxu0
    %633 = vmatprep.mubr.bf16.mxu0 %v182
    %634 = vmatmul.mubr.bf16.gmra.mxu0 %v181
    %v635 = vpop.f32.mrf.mxu0
    %v636 = vadd.f32 %v539, %v635
    %v637 = vpop.f32.mrf.mxu0
    %v638 = vpop.f32.mrf.mxu0
    %v639 = vadd.f32 %v542, %v638
    %v640 = vpop.f32.mrf.mxu0
    %641 = vdwg.mxu0
    %v642 = vmul.f32 %v580, 0.5
    %v643 = vmul.f32 %v583, 0.5
    %v644 = vmul.f32 %v588, 0.5
    %v645 = vmul.f32 %v591, 0.5
    %v646 = vmul.f32 %v596, 0.5
    %v647 = vmul.f32 %v599, 0.5
    %v648 = vmul.f32 %v604, 0.5
    %v649 = vmul.f32 %v607, 0.5
    %v650 = vmul.f32 %v612, 0.5
    %v651 = vmul.f32 %v615, 0.5
    %v652 = vmul.f32 %v620, 0.5
    %v653 = vmul.f32 %v623, 0.5
    %v654 = vmul.f32 %v628, 0.5
    %v655 = vmul.f32 %v631, 0.5
    %v656 = vmul.f32 %v636, 0.5
    %v657 = vmul.f32 %v639, 0.5
    %v658 = vtanh.pop %v642
    %v659 = vtanh.pop %v643
    %v660 = vtanh.pop %v644
    %v661 = vtanh.pop %v645
    %v662 = vtanh.pop %v646
    %v663 = vtanh.pop %v647
    %v664 = vtanh.pop %v648
    %v665 = vtanh.pop %v649
    %v666 = vtanh.pop %v650
    %v667 = vtanh.pop %v651
    %v668 = vtanh.pop %v652
    %v669 = vtanh.pop %v653
    %v670 = vtanh.pop %v654
    %v671 = vtanh.pop %v655
    %v672 = vtanh.pop %v656
    %v673 = vtanh.pop %v657
    %v674 = vmul.f32 %v658, 0.5
    %v675 = vmul.f32 %v659, 0.5
    %v676 = vmul.f32 %v660, 0.5
    %v677 = vmul.f32 %v661, 0.5
    %v678 = vmul.f32 %v662, 0.5
    %v679 = vmul.f32 %v663, 0.5
    %v680 = vmul.f32 %v664, 0.5
    %v681 = vmul.f32 %v665, 0.5
    %v682 = vmul.f32 %v666, 0.5
    %v683 = vmul.f32 %v667, 0.5
    %v684 = vmul.f32 %v668, 0.5
    %v685 = vmul.f32 %v669, 0.5
    %v686 = vmul.f32 %v670, 0.5
    %v687 = vmul.f32 %v671, 0.5
    %v688 = vmul.f32 %v672, 0.5
    %v689 = vmul.f32 %v673, 0.5
    %v690 = vadd.f32 %v674, 0.5
    %v691 = vadd.f32 %v675, 0.5
    %v692 = vadd.f32 %v676, 0.5
    %v693 = vadd.f32 %v677, 0.5
    %v694 = vadd.f32 %v678, 0.5
    %v695 = vadd.f32 %v679, 0.5
    %v696 = vadd.f32 %v680, 0.5
    %v697 = vadd.f32 %v681, 0.5
    %v698 = vadd.f32 %v682, 0.5
    %v699 = vadd.f32 %v683, 0.5
    %v700 = vadd.f32 %v684, 0.5
    %v701 = vadd.f32 %v685, 0.5
    %v702 = vadd.f32 %v686, 0.5
    %v703 = vadd.f32 %v687, 0.5
    %v704 = vadd.f32 %v688, 0.5
    %v705 = vadd.f32 %v689, 0.5
    %v706 = vpack.c.bf16 %v691, %v690
    %v707 = vpack.c.bf16 %v693, %v692
    %v708 = vpack.c.bf16 %v695, %v694
    %v709 = vpack.c.bf16 %v697, %v696
    %v710 = vpack.c.bf16 %v699, %v698
    %v711 = vpack.c.bf16 %v701, %v700
    %v712 = vpack.c.bf16 %v703, %v702
    %v713 = vpack.c.bf16 %v705, %v704
    %v714 = vld [vmem:[#allocation6] sm:$0xf]
    %v715 = vld [vmem:[#allocation6 + $0x4] sm:$0xf]
    %v716 = vld [vmem:[#allocation6 + $0x8] sm:$0xf]
    %v717 = vld [vmem:[#allocation6 + $0xc] sm:$0xf]
    %v718 = vld [vmem:[#allocation6 + $0x10] sm:$0xf]
    %v719 = vld [vmem:[#allocation6 + $0x14] sm:$0xf]
    %v720 = vld [vmem:[#allocation6 + $0x18] sm:$0xf]
    %v721 = vld [vmem:[#allocation6 + $0x1c] sm:$0xf]
    %v722 = vld [vmem:[#allocation6 + $0x20] sm:$0xf]
    %v723 = vld [vmem:[#allocation6 + $0x24] sm:$0xf]
    %v724 = vld [vmem:[#allocation6 + $0x28] sm:$0xf]
    %v725 = vld [vmem:[#allocation6 + $0x2c] sm:$0xf]
    %v726 = vld [vmem:[#allocation6 + $0x30] sm:$0xf]
    %v727 = vld [vmem:[#allocation6 + $0x34] sm:$0xf]
    %v728 = vld [vmem:[#allocation6 + $0x38] sm:$0xf]
    %v729 = vld [vmem:[#allocation6 + $0x3c] sm:$0xf]
    %v730 = vlaneseq
    %v731 = vshrl.u32 %v730, 7
    %v732 = vsub.s32 0, %v731
    %v733 = vrot.slane %v184, %v732
    %v750 = vunpack.c.l.b16 %v714
    %v751 = vunpack.c.l.b16 %v715
    %v752 = vunpack.c.l.b16 %v716
    %v753 = vunpack.c.l.b16 %v717
    %v754 = vunpack.c.l.b16 %v718
    %v755 = vunpack.c.l.b16 %v719
    %v756 = vunpack.c.l.b16 %v720
    %v757 = vunpack.c.l.b16 %v721
    %v758 = vunpack.c.l.b16 %v722
    %v759 = vunpack.c.l.b16 %v723
    %v760 = vunpack.c.l.b16 %v724
    %v761 = vunpack.c.l.b16 %v725
    %v762 = vunpack.c.l.b16 %v726
    %v763 = vunpack.c.l.b16 %v727
    %v764 = vunpack.c.l.b16 %v728
    %v765 = vunpack.c.l.b16 %v729
    %v766 = vpack.c.b16 %v751, %v750
    %v767 = vpack.c.b16 %v753, %v752
    %v768 = vpack.c.b16 %v755, %v754
    %v769 = vpack.c.b16 %v757, %v756
    %v770 = vpack.c.b16 %v759, %v758
    %v771 = vpack.c.b16 %v761, %v760
    %v772 = vpack.c.b16 %v763, %v762
    %v773 = vpack.c.b16 %v765, %v764
    %782 = vmatprep.subr.bf16.mxu0 0
    %783 = vmatpush1.bf16.msra.mxu0 %v773
    %784 = vmatprep.subr.bf16.mxu0 0
    %785 = vmatpush1.bf16.msra.mxu0 %v772
    %786 = vmatprep.subr.bf16.mxu0 0
    %787 = vmatpush1.bf16.msra.mxu0 %v771
    %788 = vmatprep.subr.bf16.mxu0 0
    %789 = vmatpush1.bf16.msra.mxu0 %v770
    %790 = vmatprep.subr.bf16.mxu0 0
    %791 = vmatpush1.bf16.msra.mxu0 %v769
    %792 = vmatprep.subr.bf16.mxu0 0
    %793 = vmatpush1.bf16.msra.mxu0 %v768
    %794 = vmatprep.subr.bf16.mxu0 0
    %795 = vmatpush1.bf16.msra.mxu0 %v767
    %796 = vmatprep.subr.bf16.mxu0 0
    %797 = vmatpush1.bf16.msra.mxu0 %v766
    %798 = vmatprep.subr.bf16.mxu0 0
    %799 = vmatpush2.bf16.msra.mxu0 0
    %800 = vmatprep.subr.bf16.mxu0 0
    %801 = vmatpush2.bf16.msra.mxu0 0
    %802 = vmatprep.subr.bf16.mxu0 0
    %803 = vmatpush2.bf16.msra.mxu0 0
    %804 = vmatprep.subr.bf16.mxu0 0
    %805 = vmatpush2.bf16.msra.mxu0 0
    %806 = vmatprep.subr.bf16.mxu0 0
    %807 = vmatpush2.bf16.msra.mxu0 0
    %808 = vmatprep.subr.bf16.mxu0 0
    %809 = vmatpush2.bf16.msra.mxu0 0
    %810 = vmatprep.subr.bf16.mxu0 0
    %811 = vmatpush2.bf16.msra.mxu0 0
    %812 = vmatprep.subr.bf16.mxu0 0
    %813 = vmatpush2.bf16.msra.mxu0 0
    %814 = vmatprep.mubr.bf16.mxu0 0
    %815 = vmatmul.mubr.bf16.gmra.mxu0 %v706
    %v816 = vpop.f32.mrf.mxu0
    %v817 = vadd.f32 %v733, %v816
    %v818 = vpop.f32.mrf.mxu0
    %v819 = vpop.f32.mrf.mxu0
    %v820 = vadd.f32 %v733, %v819
    %v821 = vpop.f32.mrf.mxu0
    %822 = vmatprep.mubr.bf16.mxu0 0
    %823 = vmatmul.mubr.bf16.gmra.mxu0 %v707
    %v824 = vpop.f32.mrf.mxu0
    %v825 = vadd.f32 %v733, %v824
    %v826 = vpop.f32.mrf.mxu0
    %v827 = vpop.f32.mrf.mxu0
    %v828 = vadd.f32 %v733, %v827
    %v829 = vpop.f32.mrf.mxu0
    %830 = vmatprep.mubr.bf16.mxu0 0
    %831 = vmatmul.mubr.bf16.gmra.mxu0 %v708
    %v832 = vpop.f32.mrf.mxu0
    %v833 = vadd.f32 %v733, %v832
    %v834 = vpop.f32.mrf.mxu0
    %v835 = vpop.f32.mrf.mxu0
    %v836 = vadd.f32 %v733, %v835
    %v837 = vpop.f32.mrf.mxu0
    %838 = vmatprep.mubr.bf16.mxu0 0
    %839 = vmatmul.mubr.bf16.gmra.mxu0 %v709
    %v840 = vpop.f32.mrf.mxu0
    %v841 = vadd.f32 %v733, %v840
    %v842 = vpop.f32.mrf.mxu0
    %v843 = vpop.f32.mrf.mxu0
    %v844 = vadd.f32 %v733, %v843
    %v845 = vpop.f32.mrf.mxu0
    %846 = vmatprep.mubr.bf16.mxu0 0
    %847 = vmatmul.mubr.bf16.gmra.mxu0 %v710
    %v848 = vpop.f32.mrf.mxu0
    %v849 = vadd.f32 %v733, %v848
    %v850 = vpop.f32.mrf.mxu0
    %v851 = vpop.f32.mrf.mxu0
    %v852 = vadd.f32 %v733, %v851
    %v853 = vpop.f32.mrf.mxu0
    %854 = vmatprep.mubr.bf16.mxu0 0
    %855 = vmatmul.mubr.bf16.gmra.mxu0 %v711
    %v856 = vpop.f32.mrf.mxu0
    %v857 = vadd.f32 %v733, %v856
    %v858 = vpop.f32.mrf.mxu0
    %v859 = vpop.f32.mrf.mxu0
    %v860 = vadd.f32 %v733, %v859
    %v861 = vpop.f32.mrf.mxu0
    %862 = vmatprep.mubr.bf16.mxu0 0
    %863 = vmatmul.mubr.bf16.gmra.mxu0 %v712
    %v864 = vpop.f32.mrf.mxu0
    %v865 = vadd.f32 %v733, %v864
    %v866 = vpop.f32.mrf.mxu0
    %v867 = vpop.f32.mrf.mxu0
    %v868 = vadd.f32 %v733, %v867
    %v869 = vpop.f32.mrf.mxu0
    %870 = vmatprep.mubr.bf16.mxu0 0
    %871 = vmatmul.mubr.bf16.gmra.mxu0 %v713
    %v872 = vpop.f32.mrf.mxu0
    %v873 = vadd.f32 %v733, %v872
    %v874 = vpop.f32.mrf.mxu0
    %v875 = vpop.f32.mrf.mxu0
    %v876 = vadd.f32 %v733, %v875
    %v877 = vpop.f32.mrf.mxu0
    %878 = vdwg.mxu0
    %v879 = vmul.f32 %v817, 0.5
    %v880 = vmul.f32 %v820, 0.5
    %v881 = vmul.f32 %v825, 0.5
    %v882 = vmul.f32 %v828, 0.5
    %v883 = vmul.f32 %v833, 0.5
    %v884 = vmul.f32 %v836, 0.5
    %v885 = vmul.f32 %v841, 0.5
    %v886 = vmul.f32 %v844, 0.5
    %v887 = vmul.f32 %v849, 0.5
    %v888 = vmul.f32 %v852, 0.5
    %v889 = vmul.f32 %v857, 0.5
    %v890 = vmul.f32 %v860, 0.5
    %v891 = vmul.f32 %v865, 0.5
    %v892 = vmul.f32 %v868, 0.5
    %v893 = vmul.f32 %v873, 0.5
    %v894 = vmul.f32 %v876, 0.5
    %v895 = vtanh.pop %v879
    %v896 = vtanh.pop %v880
    %v897 = vtanh.pop %v881
    %v898 = vtanh.pop %v882
    %v899 = vtanh.pop %v883
    %v900 = vtanh.pop %v884
    %v901 = vtanh.pop %v885
    %v902 = vtanh.pop %v886
    %v903 = vtanh.pop %v887
    %v904 = vtanh.pop %v888
    %v905 = vtanh.pop %v889
    %v906 = vtanh.pop %v890
    %v907 = vtanh.pop %v891
    %v908 = vtanh.pop %v892
    %v909 = vtanh.pop %v893
    %v910 = vtanh.pop %v894
    %v911 = vmul.f32 %v895, 0.5
    %v912 = vmul.f32 %v896, 0.5
    %v913 = vmul.f32 %v897, 0.5
    %v914 = vmul.f32 %v898, 0.5
    %v915 = vmul.f32 %v899, 0.5
    %v916 = vmul.f32 %v900, 0.5
    %v917 = vmul.f32 %v901, 0.5
    %v918 = vmul.f32 %v902, 0.5
    %v919 = vmul.f32 %v903, 0.5
    %v920 = vmul.f32 %v904, 0.5
    %v921 = vmul.f32 %v905, 0.5
    %v922 = vmul.f32 %v906, 0.5
    %v923 = vmul.f32 %v907, 0.5
    %v924 = vmul.f32 %v908, 0.5
    %v925 = vmul.f32 %v909, 0.5
    %v926 = vmul.f32 %v910, 0.5
    %v927 = vadd.f32 %v911, 0.5
    %v928 = vadd.f32 %v912, 0.5
    %v929 = vadd.f32 %v913, 0.5
    %v930 = vadd.f32 %v914, 0.5
    %v931 = vadd.f32 %v915, 0.5
    %v932 = vadd.f32 %v916, 0.5
    %v933 = vadd.f32 %v917, 0.5
    %v934 = vadd.f32 %v918, 0.5
    %v935 = vadd.f32 %v919, 0.5
    %v936 = vadd.f32 %v920, 0.5
    %v937 = vadd.f32 %v921, 0.5
    %v938 = vadd.f32 %v922, 0.5
    %v939 = vadd.f32 %v923, 0.5
    %v940 = vadd.f32 %v924, 0.5
    %v941 = vadd.f32 %v925, 0.5
    %v942 = vadd.f32 %v926, 0.5
    %v943 = vpack.c.bf16 %v928, %v927
    %v944 = vpack.c.bf16 %v930, %v929
    %v945 = vpack.c.bf16 %v932, %v931
    %v946 = vpack.c.bf16 %v934, %v933
    %v947 = vpack.c.bf16 %v936, %v935
    %v948 = vpack.c.bf16 %v938, %v937
    %v949 = vpack.c.bf16 %v940, %v939
    %v950 = vpack.c.bf16 %v942, %v941
    %v951 = vld [vmem:[#allocation7] sm:$0xf]
    %v952 = vld [vmem:[#allocation7 + $0x4] sm:$0xf]
    %v953 = vld [vmem:[#allocation7 + $0x8] sm:$0xf]
    %v954 = vld [vmem:[#allocation7 + $0xc] sm:$0xf]
    %v955 = vld [vmem:[#allocation7 + $0x10] sm:$0xf]
    %v956 = vld [vmem:[#allocation7 + $0x14] sm:$0xf]
    %v957 = vld [vmem:[#allocation7 + $0x18] sm:$0xf]
    %v958 = vld [vmem:[#allocation7 + $0x1c] sm:$0xf]
    %v959 = vld [vmem:[#allocation7 + $0x20] sm:$0xf]
    %v960 = vld [vmem:[#allocation7 + $0x24] sm:$0xf]
    %v961 = vld [vmem:[#allocation7 + $0x28] sm:$0xf]
    %v962 = vld [vmem:[#allocation7 + $0x2c] sm:$0xf]
    %v963 = vld [vmem:[#allocation7 + $0x30] sm:$0xf]
    %v964 = vld [vmem:[#allocation7 + $0x34] sm:$0xf]
    %v965 = vld [vmem:[#allocation7 + $0x38] sm:$0xf]
    %v966 = vld [vmem:[#allocation7 + $0x3c] sm:$0xf]
    %v967 = vlaneseq
    %v968 = vshrl.u32 %v967, 7
    %v969 = vsub.s32 0, %v968
    %v970 = vrot.slane %v185, %v969
    %v987 = vunpack.c.l.b16 %v951
    %v988 = vunpack.c.l.b16 %v952
    %v989 = vunpack.c.l.b16 %v953
    %v990 = vunpack.c.l.b16 %v954
    %v991 = vunpack.c.l.b16 %v955
    %v992 = vunpack.c.l.b16 %v956
    %v993 = vunpack.c.l.b16 %v957
    %v994 = vunpack.c.l.b16 %v958
    %v995 = vunpack.c.l.b16 %v959
    %v996 = vunpack.c.l.b16 %v960
    %v997 = vunpack.c.l.b16 %v961
    %v998 = vunpack.c.l.b16 %v962
    %v999 = vunpack.c.l.b16 %v963
    %v1000 = vunpack.c.l.b16 %v964
    %v1001 = vunpack.c.l.b16 %v965
    %v1002 = vunpack.c.l.b16 %v966
    %v1003 = vpack.c.b16 %v988, %v987
    %v1004 = vpack.c.b16 %v990, %v989
    %v1005 = vpack.c.b16 %v992, %v991
    %v1006 = vpack.c.b16 %v994, %v993
    %v1007 = vpack.c.b16 %v996, %v995
    %v1008 = vpack.c.b16 %v998, %v997
    %v1009 = vpack.c.b16 %v1000, %v999
    %v1010 = vpack.c.b16 %v1002, %v1001
    %1019 = vmatprep.subr.bf16.mxu0 0
    %1020 = vmatpush1.bf16.msra.mxu0 %v1010
    %1021 = vmatprep.subr.bf16.mxu0 0
    %1022 = vmatpush1.bf16.msra.mxu0 %v1009
    %1023 = vmatprep.subr.bf16.mxu0 0
    %1024 = vmatpush1.bf16.msra.mxu0 %v1008
    %1025 = vmatprep.subr.bf16.mxu0 0
    %1026 = vmatpush1.bf16.msra.mxu0 %v1007
    %1027 = vmatprep.subr.bf16.mxu0 0
    %1028 = vmatpush1.bf16.msra.mxu0 %v1006
    %1029 = vmatprep.subr.bf16.mxu0 0
    %1030 = vmatpush1.bf16.msra.mxu0 %v1005
    %1031 = vmatprep.subr.bf16.mxu0 0
    %1032 = vmatpush1.bf16.msra.mxu0 %v1004
    %1033 = vmatprep.subr.bf16.mxu0 0
    %1034 = vmatpush1.bf16.msra.mxu0 %v1003
    %1035 = vmatprep.subr.bf16.mxu0 0
    %1036 = vmatpush2.bf16.msra.mxu0 0
    %1037 = vmatprep.subr.bf16.mxu0 0
    %1038 = vmatpush2.bf16.msra.mxu0 0
    %1039 = vmatprep.subr.bf16.mxu0 0
    %1040 = vmatpush2.bf16.msra.mxu0 0
    %1041 = vmatprep.subr.bf16.mxu0 0
    %1042 = vmatpush2.bf16.msra.mxu0 0
    %1043 = vmatprep.subr.bf16.mxu0 0
    %1044 = vmatpush2.bf16.msra.mxu0 0
    %1045 = vmatprep.subr.bf16.mxu0 0
    %1046 = vmatpush2.bf16.msra.mxu0 0
    %1047 = vmatprep.subr.bf16.mxu0 0
    %1048 = vmatpush2.bf16.msra.mxu0 0
    %1049 = vmatprep.subr.bf16.mxu0 0
    %1050 = vmatpush2.bf16.msra.mxu0 0
    %1051 = vmatprep.mubr.bf16.mxu0 0
    %1052 = vmatmul.mubr.bf16.gmra.mxu0 %v943
    %v1053 = vpop.f32.mrf.mxu0
    %v1054 = vadd.f32 %v970, %v1053
    %v1055 = vpop.f32.mrf.mxu0
    %v1056 = vpop.f32.mrf.mxu0
    %v1057 = vadd.f32 %v970, %v1056
    %v1058 = vpop.f32.mrf.mxu0
    %1059 = vmatprep.mubr.bf16.mxu0 0
    %1060 = vmatmul.mubr.bf16.gmra.mxu0 %v944
    %v1061 = vpop.f32.mrf.mxu0
    %v1062 = vadd.f32 %v970, %v1061
    %v1063 = vpop.f32.mrf.mxu0
    %v1064 = vpop.f32.mrf.mxu0
    %v1065 = vadd.f32 %v970, %v1064
    %v1066 = vpop.f32.mrf.mxu0
    %1067 = vmatprep.mubr.bf16.mxu0 0
    %1068 = vmatmul.mubr.bf16.gmra.mxu0 %v945
    %v1069 = vpop.f32.mrf.mxu0
    %v1070 = vadd.f32 %v970, %v1069
    %v1071 = vpop.f32.mrf.mxu0
    %v1072 = vpop.f32.mrf.mxu0
    %v1073 = vadd.f32 %v970, %v1072
    %v1074 = vpop.f32.mrf.mxu0
    %1075 = vmatprep.mubr.bf16.mxu0 0
    %1076 = vmatmul.mubr.bf16.gmra.mxu0 %v946
    %v1077 = vpop.f32.mrf.mxu0
    %v1078 = vadd.f32 %v970, %v1077
    %v1079 = vpop.f32.mrf.mxu0
    %v1080 = vpop.f32.mrf.mxu0
    %v1081 = vadd.f32 %v970, %v1080
    %v1082 = vpop.f32.mrf.mxu0
    %1083 = vmatprep.mubr.bf16.mxu0 0
    %1084 = vmatmul.mubr.bf16.gmra.mxu0 %v947
    %v1085 = vpop.f32.mrf.mxu0
    %v1086 = vadd.f32 %v970, %v1085
    %v1087 = vpop.f32.mrf.mxu0
    %v1088 = vpop.f32.mrf.mxu0
    %v1089 = vadd.f32 %v970, %v1088
    %v1090 = vpop.f32.mrf.mxu0
    %1091 = vmatprep.mubr.bf16.mxu0 0
    %1092 = vmatmul.mubr.bf16.gmra.mxu0 %v948
    %v1093 = vpop.f32.mrf.mxu0
    %v1094 = vadd.f32 %v970, %v1093
    %v1095 = vpop.f32.mrf.mxu0
    %v1096 = vpop.f32.mrf.mxu0
    %v1097 = vadd.f32 %v970, %v1096
    %v1098 = vpop.f32.mrf.mxu0
    %1099 = vmatprep.mubr.bf16.mxu0 0
    %1100 = vmatmul.mubr.bf16.gmra.mxu0 %v949
    %v1101 = vpop.f32.mrf.mxu0
    %v1102 = vadd.f32 %v970, %v1101
    %v1103 = vpop.f32.mrf.mxu0
    %v1104 = vpop.f32.mrf.mxu0
    %v1105 = vadd.f32 %v970, %v1104
    %v1106 = vpop.f32.mrf.mxu0
    %1107 = vmatprep.mubr.bf16.mxu0 0
    %1108 = vmatmul.mubr.bf16.gmra.mxu0 %v950
    %v1109 = vpop.f32.mrf.mxu0
    %v1110 = vadd.f32 %v970, %v1109
    %v1111 = vpop.f32.mrf.mxu0
    %v1112 = vpop.f32.mrf.mxu0
    %v1113 = vadd.f32 %v970, %v1112
    %v1114 = vpop.f32.mrf.mxu0
    %1115 = vdwg.mxu0
    %v1116 = vmul.f32 %v1054, 0.5
    %v1117 = vmul.f32 %v1057, 0.5
    %v1118 = vmul.f32 %v1062, 0.5
    %v1119 = vmul.f32 %v1065, 0.5
    %v1120 = vmul.f32 %v1070, 0.5
    %v1121 = vmul.f32 %v1073, 0.5
    %v1122 = vmul.f32 %v1078, 0.5
    %v1123 = vmul.f32 %v1081, 0.5
    %v1124 = vmul.f32 %v1086, 0.5
    %v1125 = vmul.f32 %v1089, 0.5
    %v1126 = vmul.f32 %v1094, 0.5
    %v1127 = vmul.f32 %v1097, 0.5
    %v1128 = vmul.f32 %v1102, 0.5
    %v1129 = vmul.f32 %v1105, 0.5
    %v1130 = vmul.f32 %v1110, 0.5
    %v1131 = vmul.f32 %v1113, 0.5
    %v1132 = vtanh.pop %v1116
    %v1133 = vtanh.pop %v1117
    %v1134 = vtanh.pop %v1118
    %v1135 = vtanh.pop %v1119
    %v1136 = vtanh.pop %v1120
    %v1137 = vtanh.pop %v1121
    %v1138 = vtanh.pop %v1122
    %v1139 = vtanh.pop %v1123
    %v1140 = vtanh.pop %v1124
    %v1141 = vtanh.pop %v1125
    %v1142 = vtanh.pop %v1126
    %v1143 = vtanh.pop %v1127
    %v1144 = vtanh.pop %v1128
    %v1145 = vtanh.pop %v1129
    %v1146 = vtanh.pop %v1130
    %v1147 = vtanh.pop %v1131
    %v1148 = vmul.f32 %v1132, 0.5
    %v1149 = vmul.f32 %v1133, 0.5
    %v1150 = vmul.f32 %v1134, 0.5
    %v1151 = vmul.f32 %v1135, 0.5
    %v1152 = vmul.f32 %v1136, 0.5
    %v1153 = vmul.f32 %v1137, 0.5
    %v1154 = vmul.f32 %v1138, 0.5
    %v1155 = vmul.f32 %v1139, 0.5
    %v1156 = vmul.f32 %v1140, 0.5
    %v1157 = vmul.f32 %v1141, 0.5
    %v1158 = vmul.f32 %v1142, 0.5
    %v1159 = vmul.f32 %v1143, 0.5
    %v1160 = vmul.f32 %v1144, 0.5
    %v1161 = vmul.f32 %v1145, 0.5
    %v1162 = vmul.f32 %v1146, 0.5
    %v1163 = vmul.f32 %v1147, 0.5
    %v1164 = vadd.f32 %v1148, 0.5
    %v1165 = vadd.f32 %v1149, 0.5
    %v1166 = vadd.f32 %v1150, 0.5
    %v1167 = vadd.f32 %v1151, 0.5
    %v1168 = vadd.f32 %v1152, 0.5
    %v1169 = vadd.f32 %v1153, 0.5
    %v1170 = vadd.f32 %v1154, 0.5
    %v1171 = vadd.f32 %v1155, 0.5
    %v1172 = vadd.f32 %v1156, 0.5
    %v1173 = vadd.f32 %v1157, 0.5
    %v1174 = vadd.f32 %v1158, 0.5
    %v1175 = vadd.f32 %v1159, 0.5
    %v1176 = vadd.f32 %v1160, 0.5
    %v1177 = vadd.f32 %v1161, 0.5
    %v1178 = vadd.f32 %v1162, 0.5
    %v1179 = vadd.f32 %v1163, 0.5
    %v1180 = vlaneseq
    %v1181 = vshrl.u32 %v1180, 7
    %v1182 = vsub.s32 0, %v1181
    %v1183 = vrot.slane %v187, %v1182
    %v1184 = vmul.f32 %v1164, %v1183
    %v1185 = vmul.f32 %v1165, %v1183
    %v1186 = vmul.f32 %v1166, %v1183
    %v1187 = vmul.f32 %v1167, %v1183
    %v1188 = vmul.f32 %v1168, %v1183
    %v1189 = vmul.f32 %v1169, %v1183
    %v1190 = vmul.f32 %v1170, %v1183
    %v1191 = vmul.f32 %v1171, %v1183
    %v1192 = vmul.f32 %v1172, %v1183
    %v1193 = vmul.f32 %v1173, %v1183
    %v1194 = vmul.f32 %v1174, %v1183
    %v1195 = vmul.f32 %v1175, %v1183
    %v1196 = vmul.f32 %v1176, %v1183
    %v1197 = vmul.f32 %v1177, %v1183
    %v1198 = vmul.f32 %v1178, %v1183
    %v1199 = vmul.f32 %v1179, %v1183
    %1200 = vadd.xlane.f32.xlu0 %v1184
    %v1201 = vpop.xlane.xlu0 %1200
    %1202 = vadd.xlane.f32.xlu0 %v1185
    %v1203 = vpop.xlane.xlu0 %1202
    %1204 = vadd.xlane.f32.xlu0 %v1186
    %v1205 = vpop.xlane.xlu0 %1204
    %1206 = vadd.xlane.f32.xlu0 %v1187
    %v1207 = vpop.xlane.xlu0 %1206
    %1208 = vadd.xlane.f32.xlu0 %v1188
    %v1209 = vpop.xlane.xlu0 %1208
    %1210 = vadd.xlane.f32.xlu0 %v1189
    %v1211 = vpop.xlane.xlu0 %1210
    %1212 = vadd.xlane.f32.xlu0 %v1190
    %v1213 = vpop.xlane.xlu0 %1212
    %1214 = vadd.xlane.f32.xlu0 %v1191
    %v1215 = vpop.xlane.xlu0 %1214
    %1216 = vadd.xlane.f32.xlu0 %v1192
    %v1217 = vpop.xlane.xlu0 %1216
    %1218 = vadd.xlane.f32.xlu0 %v1193
    %v1219 = vpop.xlane.xlu0 %1218
    %1220 = vadd.xlane.f32.xlu0 %v1194
    %v1221 = vpop.xlane.xlu0 %1220
    %1222 = vadd.xlane.f32.xlu0 %v1195
    %v1223 = vpop.xlane.xlu0 %1222
    %1224 = vadd.xlane.f32.xlu0 %v1196
    %v1225 = vpop.xlane.xlu0 %1224
    %1226 = vadd.xlane.f32.xlu0 %v1197
    %v1227 = vpop.xlane.xlu0 %1226
    %1228 = vadd.xlane.f32.xlu0 %v1198
    %v1229 = vpop.xlane.xlu0 %1228
    %1230 = vadd.xlane.f32.xlu0 %v1199
    %v1231 = vpop.xlane.xlu0 %1230
    %v1233 = vlaneseq
    %v1234 = vshrl.u32 %v1233, 7
    %v1235 = vsub.s32 0, %v1234
    %v1236 = vrot.slane %v186, %v1235
    %1238 = vbcast.lane.b32.xlu0 %v1236, 256
    %v1239 = vpop.permute.xlu0 %1238
    %s1241 = sor.u32 256, 8
    %1242 = vbcast.lane.b32.xlu0 %v1236, %s1241
    %v1243 = vpop.permute.xlu0 %1242
    %s1245 = sor.u32 256, 16
    %1246 = vbcast.lane.b32.xlu0 %v1236, %s1245
    %v1247 = vpop.permute.xlu0 %1246
    %s1249 = sor.u32 256, 24
    %1250 = vbcast.lane.b32.xlu0 %v1236, %s1249
    %v1251 = vpop.permute.xlu0 %1250
    %s1253 = sor.u32 256, 32
    %1254 = vbcast.lane.b32.xlu0 %v1236, %s1253
    %v1255 = vpop.permute.xlu0 %1254
    %s1257 = sor.u32 256, 40
    %1258 = vbcast.lane.b32.xlu0 %v1236, %s1257
    %v1259 = vpop.permute.xlu0 %1258
    %s1261 = sor.u32 256, 48
    %1262 = vbcast.lane.b32.xlu0 %v1236, %s1261
    %v1263 = vpop.permute.xlu0 %1262
    %s1265 = sor.u32 256, 56
    %1266 = vbcast.lane.b32.xlu0 %v1236, %s1265
    %v1267 = vpop.permute.xlu0 %1266
    %s1269 = sor.u32 256, 64
    %1270 = vbcast.lane.b32.xlu0 %v1236, %s1269
    %v1271 = vpop.permute.xlu0 %1270
    %s1273 = sor.u32 256, 72
    %1274 = vbcast.lane.b32.xlu0 %v1236, %s1273
    %v1275 = vpop.permute.xlu0 %1274
    %s1277 = sor.u32 256, 80
    %1278 = vbcast.lane.b32.xlu0 %v1236, %s1277
    %v1279 = vpop.permute.xlu0 %1278
    %s1281 = sor.u32 256, 88
    %1282 = vbcast.lane.b32.xlu0 %v1236, %s1281
    %v1283 = vpop.permute.xlu0 %1282
    %s1285 = sor.u32 256, 96
    %1286 = vbcast.lane.b32.xlu0 %v1236, %s1285
    %v1287 = vpop.permute.xlu0 %1286
    %s1289 = sor.u32 256, 104
    %1290 = vbcast.lane.b32.xlu0 %v1236, %s1289
    %v1291 = vpop.permute.xlu0 %1290
    %s1293 = sor.u32 256, 112
    %1294 = vbcast.lane.b32.xlu0 %v1236, %s1293
    %v1295 = vpop.permute.xlu0 %1294
    %s1297 = sor.u32 256, 120
    %1298 = vbcast.lane.b32.xlu0 %v1236, %s1297
    %v1299 = vpop.permute.xlu0 %1298
    %v1316 = vadd.f32 %v1201, %v1239
    %v1317 = vadd.f32 %v1203, %v1243
    %v1318 = vadd.f32 %v1205, %v1247
    %v1319 = vadd.f32 %v1207, %v1251
    %v1320 = vadd.f32 %v1209, %v1255
    %v1321 = vadd.f32 %v1211, %v1259
    %v1322 = vadd.f32 %v1213, %v1263
    %v1323 = vadd.f32 %v1215, %v1267
    %v1324 = vadd.f32 %v1217, %v1271
    %v1325 = vadd.f32 %v1219, %v1275
    %v1326 = vadd.f32 %v1221, %v1279
    %v1327 = vadd.f32 %v1223, %v1283
    %v1328 = vadd.f32 %v1225, %v1287
    %v1329 = vadd.f32 %v1227, %v1291
    %v1330 = vadd.f32 %v1229, %v1295
    %v1331 = vadd.f32 %v1231, %v1299
    %1348 = vset.pattern.permute.xlu0 0
    %1349 = vperm.xlu0 %1348, %v1316
    %v1350 = vpop.permute.xlu0 %1349
    %1351 = vset.pattern.permute.xlu0 0
    %1352 = vperm.xlu0 %1351, %v1317
    %v1353 = vpop.permute.xlu0 %1352
    %1354 = vset.pattern.permute.xlu0 0
    %1355 = vperm.xlu0 %1354, %v1318
    %v1356 = vpop.permute.xlu0 %1355
    %1357 = vset.pattern.permute.xlu0 0
    %1358 = vperm.xlu0 %1357, %v1319
    %v1359 = vpop.permute.xlu0 %1358
    %1360 = vset.pattern.permute.xlu0 0
    %1361 = vperm.xlu0 %1360, %v1320
    %v1362 = vpop.permute.xlu0 %1361
    %1363 = vset.pattern.permute.xlu0 0
    %1364 = vperm.xlu0 %1363, %v1321
    %v1365 = vpop.permute.xlu0 %1364
    %1366 = vset.pattern.permute.xlu0 0
    %1367 = vperm.xlu0 %1366, %v1322
    %v1368 = vpop.permute.xlu0 %1367
    %1369 = vset.pattern.permute.xlu0 0
    %1370 = vperm.xlu0 %1369, %v1323
    %v1371 = vpop.permute.xlu0 %1370
    %1372 = vset.pattern.permute.xlu0 0
    %1373 = vperm.xlu0 %1372, %v1324
    %v1374 = vpop.permute.xlu0 %1373
    %1375 = vset.pattern.permute.xlu0 0
    %1376 = vperm.xlu0 %1375, %v1325
    %v1377 = vpop.permute.xlu0 %1376
    %1378 = vset.pattern.permute.xlu0 0
    %1379 = vperm.xlu0 %1378, %v1326
    %v1380 = vpop.permute.xlu0 %1379
    %1381 = vset.pattern.permute.xlu0 0
    %1382 = vperm.xlu0 %1381, %v1327
    %v1383 = vpop.permute.xlu0 %1382
    %1384 = vset.pattern.permute.xlu0 0
    %1385 = vperm.xlu0 %1384, %v1328
    %v1386 = vpop.permute.xlu0 %1385
    %1387 = vset.pattern.permute.xlu0 0
    %1388 = vperm.xlu0 %1387, %v1329
    %v1389 = vpop.permute.xlu0 %1388
    %1390 = vset.pattern.permute.xlu0 0
    %1391 = vperm.xlu0 %1390, %v1330
    %v1392 = vpop.permute.xlu0 %1391
    %1393 = vset.pattern.permute.xlu0 0
    %1394 = vperm.xlu0 %1393, %v1331
    %v1395 = vpop.permute.xlu0 %1394
    %v1396 = vlaneseq
    %v1397 = vand.u32 %v1396, 127
    %v1398 = vlaneseq
    %v1399 = vshrl.u32 %v1398, 7
    %v1400 = vsub.s32 %v1397, %v1399
    %v1401 = vrot.slane %v1350, %v1400
    %v1402 = vadd.s32 %v1397, 4294967288
    %v1403 = vlaneseq
    %v1404 = vshrl.u32 %v1403, 7
    %v1405 = vsub.s32 %v1402, %v1404
    %v1406 = vrot.slane %v1353, %v1405
    %vm1407 = vcmask 130112
    %v1408 = vsel %vm1407, %v1406, %v1401
    %v1409 = vadd.s32 %v1397, 4294967280
    %v1410 = vlaneseq
    %v1411 = vshrl.u32 %v1410, 7
    %v1412 = vsub.s32 %v1409, %v1411
    %v1413 = vrot.slane %v1356, %v1412
    %vm1414 = vcmask 195712
    %v1415 = vsel %vm1414, %v1413, %v1408
    %v1416 = vadd.s32 %v1397, 4294967272
    %v1417 = vlaneseq
    %v1418 = vshrl.u32 %v1417, 7
    %v1419 = vsub.s32 %v1416, %v1418
    %v1420 = vrot.slane %v1359, %v1419
    %vm1421 = vcmask 261312
    %v1422 = vsel %vm1421, %v1420, %v1415
    %v1423 = vadd.s32 %v1397, 4294967264
    %v1424 = vlaneseq
    %v1425 = vshrl.u32 %v1424, 7
    %v1426 = vsub.s32 %v1423, %v1425
    %v1427 = vrot.slane %v1362, %v1426
    %vm1428 = vcmask 326912
    %v1429 = vsel %vm1428, %v1427, %v1422
    %v1430 = vadd.s32 %v1397, 4294967256
    %v1431 = vlaneseq
    %v1432 = vshrl.u32 %v1431, 7
    %v1433 = vsub.s32 %v1430, %v1432
    %v1434 = vrot.slane %v1365, %v1433
    %vm1435 = vcmask 392512
    %v1436 = vsel %vm1435, %v1434, %v1429
    %v1437 = vadd.s32 %v1397, 4294967248
    %v1438 = vlaneseq
    %v1439 = vshrl.u32 %v1438, 7
    %v1440 = vsub.s32 %v1437, %v1439
    %v1441 = vrot.slane %v1368, %v1440
    %vm1442 = vcmask 458112
    %v1443 = vsel %vm1442, %v1441, %v1436
    %v1444 = vadd.s32 %v1397, 4294967240
    %v1445 = vlaneseq
    %v1446 = vshrl.u32 %v1445, 7
    %v1447 = vsub.s32 %v1444, %v1446
    %v1448 = vrot.slane %v1371, %v1447
    %vm1449 = vcmask 523712
    %v1450 = vsel %vm1449, %v1448, %v1443
    %v1451 = vadd.s32 %v1397, 4294967232
    %v1452 = vlaneseq
    %v1453 = vshrl.u32 %v1452, 7
    %v1454 = vsub.s32 %v1451, %v1453
    %v1455 = vrot.slane %v1374, %v1454
    %vm1456 = vcmask 589312
    %v1457 = vsel %vm1456, %v1455, %v1450
    %v1458 = vadd.s32 %v1397, 4294967224
    %v1459 = vlaneseq
    %v1460 = vshrl.u32 %v1459, 7
    %v1461 = vsub.s32 %v1458, %v1460
    %v1462 = vrot.slane %v1377, %v1461
    %vm1463 = vcmask 654912
    %v1464 = vsel %vm1463, %v1462, %v1457
    %v1465 = vadd.s32 %v1397, 4294967216
    %v1466 = vlaneseq
    %v1467 = vshrl.u32 %v1466, 7
    %v1468 = vsub.s32 %v1465, %v1467
    %v1469 = vrot.slane %v1380, %v1468
    %vm1470 = vcmask 720512
    %v1471 = vsel %vm1470, %v1469, %v1464
    %v1472 = vadd.s32 %v1397, 4294967208
    %v1473 = vlaneseq
    %v1474 = vshrl.u32 %v1473, 7
    %v1475 = vsub.s32 %v1472, %v1474
    %v1476 = vrot.slane %v1383, %v1475
    %vm1477 = vcmask 786112
    %v1478 = vsel %vm1477, %v1476, %v1471
    %v1479 = vadd.s32 %v1397, 4294967200
    %v1480 = vlaneseq
    %v1481 = vshrl.u32 %v1480, 7
    %v1482 = vsub.s32 %v1479, %v1481
    %v1483 = vrot.slane %v1386, %v1482
    %vm1484 = vcmask 851712
    %v1485 = vsel %vm1484, %v1483, %v1478
    %v1486 = vadd.s32 %v1397, 4294967192
    %v1487 = vlaneseq
    %v1488 = vshrl.u32 %v1487, 7
    %v1489 = vsub.s32 %v1486, %v1488
    %v1490 = vrot.slane %v1389, %v1489
    %vm1491 = vcmask 917312
    %v1492 = vsel %vm1491, %v1490, %v1485
    %v1493 = vadd.s32 %v1397, 4294967184
    %v1494 = vlaneseq
    %v1495 = vshrl.u32 %v1494, 7
    %v1496 = vsub.s32 %v1493, %v1495
    %v1497 = vrot.slane %v1392, %v1496
    %vm1498 = vcmask 982912
    %v1499 = vsel %vm1498, %v1497, %v1492
    %v1500 = vadd.s32 %v1397, 4294967176
    %v1501 = vlaneseq
    %v1502 = vshrl.u32 %v1501, 7
    %v1503 = vsub.s32 %v1500, %v1502
    %v1504 = vrot.slane %v1395, %v1503
    %vm1505 = vcmask 1048512
    %v1506 = vsel %vm1505, %v1504, %v1499
    %1508 = vst [vmem:[%s5] sm:$0x1] %v1506
    // Predicated region
    $region42: #{dense3_forward.1} parent=1 // pred_check
      _
    $region43: #{dense3_forward.1} parent=1 // pred_check_branch
      %1510 = sbr.rel (0) target = $region45
    $region44: #{dense3_forward.1} parent=1 // pred_region
      _
    $region45: #{dense3_forward.1} parent=1 // pred_fallthru
      _
    // Predicated region
    $region46: #{dense3_forward.1} parent=1 // pred_check
      _
    $region47: #{dense3_forward.1} parent=1 // pred_check_branch
      %1512 = sbr.rel (0) target = $region49
    $region48: #{dense3_forward.1} parent=1 // pred_region
      _
    $region49: #{dense3_forward.1} parent=1 // pred_fallthru
      _
    %1513 = vsyncpa [#allocation3], 1
    %1514 = vsyncpa [#allocation5], 1
    %1515 = vsyncpa [#allocation8], 1

</llo_original>
